<compile_context>
chip_gen: v5e
topology: v5e:2x2
jax: 0.10.0
libtpu: 0.0.40
codegen_flags: <defaults>
</compile_context>

<pallas_src>
import functools

import numpy as np

import jax
import jax.numpy as jnp
from jax import lax
from jax.experimental import pallas as pl
from jax.experimental.pallas import tpu as pltpu


# ----------------------------- Pallas kernel ---------------------------------

def _mlp_kernel(x_ref, *refs, num_linear, squeeze_out):
    """Fused MLP over one tile of points.

    refs = (W0, b0, W1, b1, ..., W_{L-1}, b_{L-1}, out_ref)
    Weights are (d_in_l, d_out_l), biases are (1, d_out_l), all resident in VMEM.
    """
    out_ref = refs[-1]
    wb = refs[:-1]

    x = x_ref[...].astype(jnp.float32)                       # (tile_n, d0)
    for l in range(num_linear):                              # statically unrolled
        w = wb[2 * l][...]                                   # (d_l, d_{l+1})
        b = wb[2 * l + 1][...]                               # (1, d_{l+1})
        # NOTE: HIGHEST keeps full f32 accuracy; drop to HIGH for ~2x MXU throughput
        # if the accuracy budget allows (per perf review).
        x = jnp.dot(x, w,
                    precision=lax.Precision.HIGHEST,
                    preferred_element_type=jnp.float32) + b
        if l < num_linear - 1:
            x = jnp.maximum(x, 0.0)                          # ReLU on all but last layer
    if squeeze_out:
        x = 1.0 / (1.0 + jnp.exp(-x))                        # sigmoid (EUP exp)
    out_ref[...] = x.astype(out_ref.dtype)


# ------------------------------- wrapper --------------------------------------

def _positional_embed(x, multires):
    """IDR/NeuS get_embedder: include_input, log-sampled freqs 2^0..2^(multires-1), [sin, cos]."""
    freqs = 2.0 ** np.arange(multires, dtype=np.float32)
    outs = [x]
    for f in freqs:
        outs.append(jnp.sin(x * f))
        outs.append(jnp.cos(x * f))
    return jnp.concatenate(outs, axis=-1)


def rendering_network_forward(points, normals, view_dirs, feature_vectors,
                              weights, biases, extra_weight=None, extra_bias=None, *,
                              mode="idr", multires_view=0, squeeze_out=True,
                              tile_n=128):
    """Pallas equivalent of RenderingNetwork.forward.

    weights[l]: (d_in_l, d_out_l) effective (weight-norm-folded) matrices, x @ W + b layout.
    extra_weight/extra_bias: the extra_color head (consumes the same post-ReLU activation
    as the last layer), or None.
    """
    # --- JAX glue (elementwise / layout): embedding + mode concat -------------
    if multires_view > 0:
        view_dirs = _positional_embed(view_dirs, multires_view)
    if mode == "idr":
        x = jnp.concatenate([points, view_dirs, normals, feature_vectors], axis=-1)
    elif mode == "no_view_dir":
        x = jnp.concatenate([points, normals, feature_vectors], axis=-1)
    elif mode == "no_normal":
        x = jnp.concatenate([points, view_dirs, feature_vectors], axis=-1)
    else:
        raise ValueError(f"unknown mode: {mode}")
    x = x.astype(jnp.float32)

    weights = [w.astype(jnp.float32) for w in weights]
    biases = [b.astype(jnp.float32) for b in biases]

    # --- fold extra_color into the last matmul (identical math to the PyTorch
    #     cat([lin_last(h), extra_lin(h)], -1); requires >= 2 linear layers) ----
    if extra_weight is not None:
        assert len(weights) >= 2, "extra_color requires at least 2 linear layers"
        weights[-1] = jnp.concatenate(
            [weights[-1], extra_weight.astype(jnp.float32)], axis=1)
        biases[-1] = jnp.concatenate(
            [biases[-1], extra_bias.astype(jnp.float32)], axis=0)

    n, d0 = x.shape
    num_linear = len(weights)
    d_final = weights[-1].shape[1]

    # pad N up to a multiple of tile_n (padded rows are garbage, sliced off below)
    n_pad = -(-n // tile_n) * tile_n
    if n_pad != n:
        x = jnp.pad(x, ((0, n_pad - n), (0, 0)))

    # interleaved (W, b) inputs; all resident full-block in VMEM (constant index_map)
    wb_inputs = []
    wb_specs = []
    for w, b in zip(weights, biases):
        b2 = b.reshape(1, -1)
        wb_inputs.append(w)
        wb_specs.append(pl.BlockSpec(w.shape, lambda i: (0, 0)))
        wb_inputs.append(b2)
        wb_specs.append(pl.BlockSpec(b2.shape, lambda i: (0, 0)))

    kernel = functools.partial(_mlp_kernel,
                               num_linear=num_linear,
                               squeeze_out=squeeze_out)

    out = pl.pallas_call(
        kernel,
        out_shape=jax.ShapeDtypeStruct((n_pad, d_final), jnp.float32),
        grid_spec=pltpu.PrefetchScalarGridSpec(
            num_scalar_prefetch=0,
            grid=(n_pad // tile_n,),
            in_specs=[pl.BlockSpec((tile_n, d0), lambda i: (i, 0))] + wb_specs,
            out_specs=pl.BlockSpec((tile_n, d_final), lambda i: (i, 0)),
        ),
        compiler_params=pltpu.CompilerParams(
            dimension_semantics=("parallel",)),
    )(x, *wb_inputs)

    return out[:n]


# ------------------------- reference & parameter setup ------------------------

def _weight_norm_linear_params(key, d_in, d_out):
    """PyTorch nn.utils.weight_norm(nn.Linear) with dim=0: W_eff = g * v / ||v||_row."""
    kv, kg, kb = jax.random.split(key, 3)
    v = jax.random.normal(kv, (d_out, d_in), jnp.float32)
    g = jax.random.uniform(kg, (d_out,), jnp.float32, 0.5, 1.5)
    b = jax.random.uniform(kb, (d_out,), jnp.float32, -0.1, 0.1)
    w_eff = g[:, None] * v / jnp.linalg.norm(v, axis=1, keepdims=True)
    return w_eff.T, b   # (d_in, d_out) so that y = x @ W + b


def _reference_forward(points, normals, view_dirs, feature_vectors, weights, biases,
                       extra_weight, extra_bias, *, mode, multires_view,
                       squeeze_out, extra_color):
    """Pure-JAX reference mirroring the PyTorch forward structure exactly."""
    if multires_view > 0:
        view_dirs = _positional_embed(view_dirs, multires_view)
    if mode == "idr":
        x = jnp.concatenate([points, view_dirs, normals, feature_vectors], axis=-1)
    elif mode == "no_view_dir":
        x = jnp.concatenate([points, normals, feature_vectors], axis=-1)
    elif mode == "no_normal":
        x = jnp.concatenate([points, view_dirs, feature_vectors], axis=-1)
    num_linear = len(weights)
    extra_x = None
    for l in range(num_linear):
        x = jnp.dot(x, weights[l], precision=lax.Precision.HIGHEST) + biases[l]
        if l < num_linear - 1:
            x = jnp.maximum(x, 0.0)
        if extra_color and l == num_linear - 2:
            extra_x = jnp.dot(x, extra_weight,
                              precision=lax.Precision.HIGHEST) + extra_bias
    if extra_color:
        x = jnp.concatenate([x, extra_x], axis=-1)
    if squeeze_out:
        x = 1.0 / (1.0 + jnp.exp(-x))
    return x


# ----------------------------------- demo -------------------------------------

if __name__ == "__main__":
    key = jax.random.PRNGKey(0)
    keys = jax.random.split(key, 16)

    # Small config exercising every forward-path branch:
    # 'idr' concat, view-dir embedding, weight_norm, extra_color, sigmoid squeeze.
    mode = "idr"
    d_feature, d_in, d_out, d_hidden, n_layers = 32, 9, 3, 64, 2
    multires_view, squeeze_out, extra_color = 2, True, True
    N = 256

    input_ch_view = 3 + 3 * 2 * multires_view          # embedded view-dir channels
    dims = [d_in + d_feature + (input_ch_view - 3)] + [d_hidden] * n_layers + [d_out]

    points = jax.random.normal(keys[0], (N, 3), jnp.float32)
    normals = jax.random.normal(keys[1], (N, 3), jnp.float32)
    view_dirs = jax.random.normal(keys[2], (N, 3), jnp.float32)
    feature_vectors = jax.random.normal(keys[3], (N, d_feature), jnp.float32)

    weights, biases = [], []
    for l in range(len(dims) - 1):
        w, b = _weight_norm_linear_params(keys[4 + l], dims[l], dims[l + 1])
        weights.append(w)
        biases.append(b)
    extra_w, extra_b = _weight_norm_linear_params(keys[4 + len(dims) - 1], dims[-2], d_out)

    out = rendering_network_forward(
        points, normals, view_dirs, feature_vectors,
        weights, biases,
        extra_w if extra_color else None,
        extra_b if extra_color else None,
        mode=mode, multires_view=multires_view,
        squeeze_out=squeeze_out, tile_n=128)        # tile_n=256 on v6e/v7x for large N
    jax.block_until_ready(out)

    ref = _reference_forward(
        points, normals, view_dirs, feature_vectors, weights, biases,
        extra_w, extra_b, mode=mode, multires_view=multires_view,
        squeeze_out=squeeze_out, extra_color=extra_color)

    np.testing.assert_allclose(np.asarray(out), np.asarray(ref), rtol=1e-4, atol=1e-5)
    expected_d = d_out * (2 if extra_color else 1)
    assert out.shape == (N, expected_d) and out.dtype == jnp.float32

    print("KERNEL_OK")
</pallas_src>

<mosaic_0001>
module attributes {stable_mosaic.version = 11 : i64} {
  func.func @_mlp_kernel(%arg0: i32, %arg1: memref<128x53xf32, #tpu.memory_space<vmem>>, %arg2: memref<53x64xf32, #tpu.memory_space<vmem>>, %arg3: memref<1x64xf32, #tpu.memory_space<vmem>>, %arg4: memref<64x64xf32, #tpu.memory_space<vmem>>, %arg5: memref<1x64xf32, #tpu.memory_space<vmem>>, %arg6: memref<64x6xf32, #tpu.memory_space<vmem>>, %arg7: memref<1x6xf32, #tpu.memory_space<vmem>>, %arg8: memref<128x6xf32, #tpu.memory_space<vmem>>) attributes {dimension_semantics = [#tpu.dimension_semantics<parallel>], iteration_bounds = array<i64: 2>, scalar_prefetch = 0 : i64, scratch_operands = 0 : i64, tpu.core_type = #tpu.core_type<tc>, window_params = [{transform_indices = @transform_0, window_bounds = array<i64: 128, 53>}, {pipeline_mode = #tpu.pipeline_mode<synchronous>, transform_indices = @transform_1, window_bounds = array<i64: 53, 64>}, {pipeline_mode = #tpu.pipeline_mode<synchronous>, transform_indices = @transform_2, window_bounds = array<i64: 1, 64>}, {pipeline_mode = #tpu.pipeline_mode<synchronous>, transform_indices = @transform_3, window_bounds = array<i64: 64, 64>}, {pipeline_mode = #tpu.pipeline_mode<synchronous>, transform_indices = @transform_4, window_bounds = array<i64: 1, 64>}, {pipeline_mode = #tpu.pipeline_mode<synchronous>, transform_indices = @transform_5, window_bounds = array<i64: 64, 6>}, {pipeline_mode = #tpu.pipeline_mode<synchronous>, transform_indices = @transform_6, window_bounds = array<i64: 1, 6>}, {transform_indices = @transform_7, window_bounds = array<i64: 128, 6>}]} {
    %c0 = arith.constant 0 : index
    %c0_0 = arith.constant 0 : index
    %0 = vector.load %arg1[%c0, %c0_0] : memref<128x53xf32, #tpu.memory_space<vmem>>, vector<128x53xf32>
    %c0_1 = arith.constant 0 : index
    %c0_2 = arith.constant 0 : index
    %1 = vector.load %arg2[%c0_1, %c0_2] : memref<53x64xf32, #tpu.memory_space<vmem>>, vector<53x64xf32>
    %c0_3 = arith.constant 0 : index
    %c0_4 = arith.constant 0 : index
    %2 = vector.load %arg3[%c0_3, %c0_4] : memref<1x64xf32, #tpu.memory_space<vmem>>, vector<1x64xf32>
    %cst = arith.constant dense<0.000000e+00> : vector<128x64xf32>
    %3 = tpu.matmul %0, %1, %cst {dimension_numbers = #tpu.dot_dimension_numbers<[1], [0], [0], [1], [0, 0, 1, 1], [], []>, precision = #tpu.contract_precision<fp32>} : vector<128x53xf32>, vector<53x64xf32>, vector<128x64xf32> -> vector<128x64xf32>
    %4 = vector.broadcast %2 : vector<1x64xf32> to vector<128x64xf32>
    %5 = arith.addf %3, %4 : vector<128x64xf32>
    %cst_5 = arith.constant 0.000000e+00 : f32
    %6 = vector.broadcast %cst_5 : f32 to vector<128x64xf32>
    %7 = arith.maximumf %5, %6 : vector<128x64xf32>
    %c0_6 = arith.constant 0 : index
    %c0_7 = arith.constant 0 : index
    %8 = vector.load %arg4[%c0_6, %c0_7] : memref<64x64xf32, #tpu.memory_space<vmem>>, vector<64x64xf32>
    %c0_8 = arith.constant 0 : index
    %c0_9 = arith.constant 0 : index
    %9 = vector.load %arg5[%c0_8, %c0_9] : memref<1x64xf32, #tpu.memory_space<vmem>>, vector<1x64xf32>
    %cst_10 = arith.constant dense<0.000000e+00> : vector<128x64xf32>
    %10 = tpu.matmul %7, %8, %cst_10 {dimension_numbers = #tpu.dot_dimension_numbers<[1], [0], [0], [1], [0, 0, 1, 1], [], []>, precision = #tpu.contract_precision<fp32>} : vector<128x64xf32>, vector<64x64xf32>, vector<128x64xf32> -> vector<128x64xf32>
    %11 = vector.broadcast %9 : vector<1x64xf32> to vector<128x64xf32>
    %12 = arith.addf %10, %11 : vector<128x64xf32>
    %cst_11 = arith.constant 0.000000e+00 : f32
    %13 = vector.broadcast %cst_11 : f32 to vector<128x64xf32>
    %14 = arith.maximumf %12, %13 : vector<128x64xf32>
    %c0_12 = arith.constant 0 : index
    %c0_13 = arith.constant 0 : index
    %15 = vector.load %arg6[%c0_12, %c0_13] : memref<64x6xf32, #tpu.memory_space<vmem>>, vector<64x6xf32>
    %c0_14 = arith.constant 0 : index
    %c0_15 = arith.constant 0 : index
    %16 = vector.load %arg7[%c0_14, %c0_15] : memref<1x6xf32, #tpu.memory_space<vmem>>, vector<1x6xf32>
    %cst_16 = arith.constant dense<0.000000e+00> : vector<128x6xf32>
    %17 = tpu.matmul %14, %15, %cst_16 {dimension_numbers = #tpu.dot_dimension_numbers<[1], [0], [0], [1], [0, 0, 1, 1], [], []>, precision = #tpu.contract_precision<fp32>} : vector<128x64xf32>, vector<64x6xf32>, vector<128x6xf32> -> vector<128x6xf32>
    %18 = vector.broadcast %16 : vector<1x6xf32> to vector<128x6xf32>
    %19 = arith.addf %17, %18 : vector<128x6xf32>
    %cst_17 = arith.constant 0.000000e+00 : f32
    %20 = vector.broadcast %cst_17 : f32 to vector<128x6xf32>
    %21 = arith.subf %20, %19 : vector<128x6xf32>
    %22 = math.exp %21 : vector<128x6xf32>
    %cst_18 = arith.constant 1.000000e+00 : f32
    %23 = vector.broadcast %cst_18 : f32 to vector<128x6xf32>
    %24 = arith.addf %23, %22 : vector<128x6xf32>
    %cst_19 = arith.constant 1.000000e+00 : f32
    %25 = vector.broadcast %cst_19 : f32 to vector<128x6xf32>
    %26 = arith.divf %25, %24 : vector<128x6xf32>
    %c0_20 = arith.constant 0 : index
    %c0_21 = arith.constant 0 : index
    %27 = vector.load %arg8[%c0_20, %c0_21] : memref<128x6xf32, #tpu.memory_space<vmem>>, vector<128x6xf32>
    tpu.vector_store %arg8[%c0_20, %c0_21], %26 {strides = array<i32>} : memref<128x6xf32, #tpu.memory_space<vmem>>, vector<128x6xf32>,
    return
  }
  func.func @transform_0(%arg0: i32) -> (i32, i32) {
    %c0_i32 = arith.constant 0 : i32
    %c0_i32_0 = arith.constant 0 : i32
    return %arg0, %c0_i32 : i32, i32
  }
  func.func @transform_1(%arg0: i32) -> (i32, i32) {
    %c0_i32 = arith.constant 0 : i32
    %c0_i32_0 = arith.constant 0 : i32
    %c0_i32_1 = arith.constant 0 : i32
    return %c0_i32, %c0_i32_0 : i32, i32
  }
  func.func @transform_2(%arg0: i32) -> (i32, i32) {
    %c0_i32 = arith.constant 0 : i32
    %c0_i32_0 = arith.constant 0 : i32
    %c0_i32_1 = arith.constant 0 : i32
    return %c0_i32, %c0_i32_0 : i32, i32
  }
  func.func @transform_3(%arg0: i32) -> (i32, i32) {
    %c0_i32 = arith.constant 0 : i32
    %c0_i32_0 = arith.constant 0 : i32
    %c0_i32_1 = arith.constant 0 : i32
    return %c0_i32, %c0_i32_0 : i32, i32
  }
  func.func @transform_4(%arg0: i32) -> (i32, i32) {
    %c0_i32 = arith.constant 0 : i32
    %c0_i32_0 = arith.constant 0 : i32
    %c0_i32_1 = arith.constant 0 : i32
    return %c0_i32, %c0_i32_0 : i32, i32
  }
  func.func @transform_5(%arg0: i32) -> (i32, i32) {
    %c0_i32 = arith.constant 0 : i32
    %c0_i32_0 = arith.constant 0 : i32
    %c0_i32_1 = arith.constant 0 : i32
    return %c0_i32, %c0_i32_0 : i32, i32
  }
  func.func @transform_6(%arg0: i32) -> (i32, i32) {
    %c0_i32 = arith.constant 0 : i32
    %c0_i32_0 = arith.constant 0 : i32
    %c0_i32_1 = arith.constant 0 : i32
    return %c0_i32, %c0_i32_0 : i32, i32
  }
  func.func @transform_7(%arg0: i32) -> (i32, i32) {
    %c0_i32 = arith.constant 0 : i32
    %c0_i32_0 = arith.constant 0 : i32
    return %arg0, %c0_i32 : i32, i32
  }
}

</mosaic_0001>

<llo_original>
// kernel: tpu_custom_call.1
$region0: #{tpu_custom_call.1}
  #allocation0 [shape = 'u32[]', space=smem, size = 0x4, offset = 0x4, fixed_abs, tag = 'smem constant byte address 0x4 - core index']
  #allocation1 [shape = 'u32[72,128]{1,0:T(1,128)}', space=vmem, size = 0x9000, scoped, tag = 'internal scratch']
  %s0 = inlined_call_operand.vmem [shape: f32[256,53], index: 0, kind: input, shape index: {}]
  %s1 = inlined_call_operand.vmem [shape: f32[53,64], index: 1, kind: input, shape index: {}]
  %s2 = inlined_call_operand.vmem [shape: f32[1,64], index: 2, kind: input, shape index: {}]
  %s3 = inlined_call_operand.vmem [shape: f32[64,64], index: 3, kind: input, shape index: {}]
  %s4 = inlined_call_operand.vmem [shape: f32[1,64], index: 4, kind: input, shape index: {}]
  %s5 = inlined_call_operand.vmem [shape: f32[64,6], index: 5, kind: input, shape index: {}]
  %s6 = inlined_call_operand.vmem [shape: f32[1,6], index: 6, kind: input, shape index: {}]
  %s7 = inlined_call_operand.vmem [shape: f32[256,6], index: 7, kind: output, shape index: {}]
  %s8 = sld [smem:[#allocation0]]
  $region61: #{tpu_custom_call.1} parent=0
    _
  %s10 = ssub.s32 1, %s8
  %s11 = scalar_select 0, %s10, %s8
  loop: start=0, step=1, limit=4
  $region2: #{tpu_custom_call.1} parent=0 // loop_pre_header
    _
  $region3: #{tpu_custom_call.1} parent=0 // loop_header
    %s13 = sphi 0, %s17
    %p14 = scmp.ge.s32.totalorder %s13, 4
    %s23 = sphi 0, %s25
    %s26 = sphi 0, %s23
    %s27 = sphi 0, %s26
    %s43 = sphi 0, %s27
    %s47 = sphi 0, %s47
    %s49 = sphi 0, %s47
    %s50 = sphi 0, %s49
    %s64 = sphi 0, %s50
    %s68 = sphi 0, %s68
    %s70 = sphi 0, %s68
    %s71 = sphi 0, %s70
    %s85 = sphi 0, %s71
    %s89 = sphi 0, %s89
    %s91 = sphi 0, %s89
    %s92 = sphi 0, %s91
    %s106 = sphi 0, %s92
    %s110 = sphi 0, %s110
    %s112 = sphi 0, %s110
    %s113 = sphi 0, %s112
    %s127 = sphi 0, %s113
    %s131 = sphi 0, %s131
    %s133 = sphi 0, %s131
    %s134 = sphi 0, %s133
    %s148 = sphi 0, %s134
    %s152 = sphi 0, %s152
    %s154 = sphi 0, %s152
    %s155 = sphi 0, %s154
    %s169 = sphi 0, %s155
    %s175 = sphi 0, %s177
    %s178 = sphi 0, %s175
    %s179 = sphi 0, %s178
    %s195 = sphi 0, %s179
  $region4: #{tpu_custom_call.1} parent=0 // loop_header_branch
    %16 = sbr.rel (%p14) target = $region8
  $region5: #{tpu_custom_call.1} parent=0 // loop_body
    %s18 = ssub.s32 %s13, 1
    %s19 = ssub.s32 %s13, 2
    %s20 = sadd.s32 %s13, 1
    %s21 = ssub.s32 %s13, %s20
    %p22 = scmp.eq.s32.totalorder %s21, 0
    %s24 = sadd.s32 %s23, 1
    %s25 = scalar_select %p22, %s23, %s24
    %p28 = pneg %p22
    %p29 = scmp.eq.s32.totalorder %s13, 1
    %p30 = por %p28, %p29
    %p31 = scmp.ne.s32.totalorder %s23, %s26
    %p32 = scmp.eq.s32.totalorder %s13, 0
    %p33 = por %p31, %p32
    %p34 = scmp.ne.s32.totalorder %s23, %s26
    %p35 = scmp.eq.s32.totalorder %s18, 1
    %p36 = por %p34, %p35
    %p37 = scmp.ne.s32.totalorder %s26, %s27
    %p38 = scmp.eq.s32.totalorder %s18, 0
    %p39 = por %p37, %p38
    %p40 = scmp.ne.s32.totalorder %s26, %s27
    %p41 = scmp.eq.s32.totalorder %s19, 1
    %p42 = por %p40, %p41
    %p44 = scmp.ne.s32.totalorder %s27, %s43
    %p45 = scmp.eq.s32.totalorder %s19, 0
    %p46 = por %p44, %p45
    %s48 = sadd.s32 %s47, 1
    %p51 = scmp.eq.s32.totalorder %s13, 1
    %p52 = scmp.ne.s32.totalorder %s47, %s49
    %p53 = scmp.eq.s32.totalorder %s13, 0
    %p54 = por %p52, %p53
    %p55 = scmp.ne.s32.totalorder %s47, %s49
    %p56 = scmp.eq.s32.totalorder %s18, 1
    %p57 = por %p55, %p56
    %p58 = scmp.ne.s32.totalorder %s49, %s50
    %p59 = scmp.eq.s32.totalorder %s18, 0
    %p60 = por %p58, %p59
    %p61 = scmp.ne.s32.totalorder %s49, %s50
    %p62 = scmp.eq.s32.totalorder %s19, 1
    %p63 = por %p61, %p62
    %p65 = scmp.ne.s32.totalorder %s50, %s64
    %p66 = scmp.eq.s32.totalorder %s19, 0
    %p67 = por %p65, %p66
    %s69 = sadd.s32 %s68, 1
    %p72 = scmp.eq.s32.totalorder %s13, 1
    %p73 = scmp.ne.s32.totalorder %s68, %s70
    %p74 = scmp.eq.s32.totalorder %s13, 0
    %p75 = por %p73, %p74
    %p76 = scmp.ne.s32.totalorder %s68, %s70
    %p77 = scmp.eq.s32.totalorder %s18, 1
    %p78 = por %p76, %p77
    %p79 = scmp.ne.s32.totalorder %s70, %s71
    %p80 = scmp.eq.s32.totalorder %s18, 0
    %p81 = por %p79, %p80
    %p82 = scmp.ne.s32.totalorder %s70, %s71
    %p83 = scmp.eq.s32.totalorder %s19, 1
    %p84 = por %p82, %p83
    %p86 = scmp.ne.s32.totalorder %s71, %s85
    %p87 = scmp.eq.s32.totalorder %s19, 0
    %p88 = por %p86, %p87
    %s90 = sadd.s32 %s89, 1
    %p93 = scmp.eq.s32.totalorder %s13, 1
    %p94 = scmp.ne.s32.totalorder %s89, %s91
    %p95 = scmp.eq.s32.totalorder %s13, 0
    %p96 = por %p94, %p95
    %p97 = scmp.ne.s32.totalorder %s89, %s91
    %p98 = scmp.eq.s32.totalorder %s18, 1
    %p99 = por %p97, %p98
    %p100 = scmp.ne.s32.totalorder %s91, %s92
    %p101 = scmp.eq.s32.totalorder %s18, 0
    %p102 = por %p100, %p101
    %p103 = scmp.ne.s32.totalorder %s91, %s92
    %p104 = scmp.eq.s32.totalorder %s19, 1
    %p105 = por %p103, %p104
    %p107 = scmp.ne.s32.totalorder %s92, %s106
    %p108 = scmp.eq.s32.totalorder %s19, 0
    %p109 = por %p107, %p108
    %s111 = sadd.s32 %s110, 1
    %p114 = scmp.eq.s32.totalorder %s13, 1
    %p115 = scmp.ne.s32.totalorder %s110, %s112
    %p116 = scmp.eq.s32.totalorder %s13, 0
    %p117 = por %p115, %p116
    %p118 = scmp.ne.s32.totalorder %s110, %s112
    %p119 = scmp.eq.s32.totalorder %s18, 1
    %p120 = por %p118, %p119
    %p121 = scmp.ne.s32.totalorder %s112, %s113
    %p122 = scmp.eq.s32.totalorder %s18, 0
    %p123 = por %p121, %p122
    %p124 = scmp.ne.s32.totalorder %s112, %s113
    %p125 = scmp.eq.s32.totalorder %s19, 1
    %p126 = por %p124, %p125
    %p128 = scmp.ne.s32.totalorder %s113, %s127
    %p129 = scmp.eq.s32.totalorder %s19, 0
    %p130 = por %p128, %p129
    %s132 = sadd.s32 %s131, 1
    %p135 = scmp.eq.s32.totalorder %s13, 1
    %p136 = scmp.ne.s32.totalorder %s131, %s133
    %p137 = scmp.eq.s32.totalorder %s13, 0
    %p138 = por %p136, %p137
    %p139 = scmp.ne.s32.totalorder %s131, %s133
    %p140 = scmp.eq.s32.totalorder %s18, 1
    %p141 = por %p139, %p140
    %p142 = scmp.ne.s32.totalorder %s133, %s134
    %p143 = scmp.eq.s32.totalorder %s18, 0
    %p144 = por %p142, %p143
    %p145 = scmp.ne.s32.totalorder %s133, %s134
    %p146 = scmp.eq.s32.totalorder %s19, 1
    %p147 = por %p145, %p146
    %p149 = scmp.ne.s32.totalorder %s134, %s148
    %p150 = scmp.eq.s32.totalorder %s19, 0
    %p151 = por %p149, %p150
    %s153 = sadd.s32 %s152, 1
    %p156 = scmp.eq.s32.totalorder %s13, 1
    %p157 = scmp.ne.s32.totalorder %s152, %s154
    %p158 = scmp.eq.s32.totalorder %s13, 0
    %p159 = por %p157, %p158
    %p160 = scmp.ne.s32.totalorder %s152, %s154
    %p161 = scmp.eq.s32.totalorder %s18, 1
    %p162 = por %p160, %p161
    %p163 = scmp.ne.s32.totalorder %s154, %s155
    %p164 = scmp.eq.s32.totalorder %s18, 0
    %p165 = por %p163, %p164
    %p166 = scmp.ne.s32.totalorder %s154, %s155
    %p167 = scmp.eq.s32.totalorder %s19, 1
    %p168 = por %p166, %p167
    %p170 = scmp.ne.s32.totalorder %s155, %s169
    %p171 = scmp.eq.s32.totalorder %s19, 0
    %p172 = por %p170, %p171
    %s173 = ssub.s32 %s13, %s20
    %p174 = scmp.eq.s32.totalorder %s173, 0
    %s176 = sadd.s32 %s175, 1
    %s177 = scalar_select %p174, %s175, %s176
    %p180 = pneg %p174
    %p181 = scmp.eq.s32.totalorder %s13, 1
    %p182 = por %p180, %p181
    %p183 = scmp.ne.s32.totalorder %s175, %s178
    %p184 = scmp.eq.s32.totalorder %s13, 0
    %p185 = por %p183, %p184
    %p186 = scmp.ne.s32.totalorder %s175, %s178
    %p187 = scmp.eq.s32.totalorder %s18, 1
    %p188 = por %p186, %p187
    %p189 = scmp.ne.s32.totalorder %s178, %s179
    %p190 = scmp.eq.s32.totalorder %s18, 0
    %p191 = por %p189, %p190
    %p192 = scmp.ne.s32.totalorder %s178, %s179
    %p193 = scmp.eq.s32.totalorder %s19, 1
    %p194 = por %p192, %p193
    %p196 = scmp.ne.s32.totalorder %s179, %s195
    %p197 = scmp.eq.s32.totalorder %s19, 0
    %p198 = por %p196, %p197
    %p199 = scmp.le.s32.totalorder 1, %s13
    %p200 = scmp.lt.s32.totalorder %s13, 3
    %p201 = pnand %p199, %p200
    %p202 = pneg %p201
    // Predicated region
    $region9: #{tpu_custom_call.1} parent=5 // pred_check
      _
    $region10: #{tpu_custom_call.1} parent=5 // pred_check_branch
      %204 = sbr.rel (%p201) target = $region12
    $region11: #{tpu_custom_call.1} parent=5 // pred_region
      %s205 = ssub.s32 %s13, 1
      // Predicated region
      $region13: #{tpu_custom_call.1} parent=11 // pred_check
        %p206 = pneg %p60
      $region14: #{tpu_custom_call.1} parent=11 // pred_check_branch
        %208 = sbr.rel (%p206) target = $region16
      $region15: #{tpu_custom_call.1} parent=11 // pred_region
        _
      $region16: #{tpu_custom_call.1} parent=11 // pred_fallthru
        _
      // Predicated region
      $region17: #{tpu_custom_call.1} parent=11 // pred_check
        %p209 = pneg %p81
      $region18: #{tpu_custom_call.1} parent=11 // pred_check_branch
        %211 = sbr.rel (%p209) target = $region20
      $region19: #{tpu_custom_call.1} parent=11 // pred_region
        _
      $region20: #{tpu_custom_call.1} parent=11 // pred_fallthru
        _
      // Predicated region
      $region21: #{tpu_custom_call.1} parent=11 // pred_check
        %p212 = pneg %p102
      $region22: #{tpu_custom_call.1} parent=11 // pred_check_branch
        %214 = sbr.rel (%p212) target = $region24
      $region23: #{tpu_custom_call.1} parent=11 // pred_region
        _
      $region24: #{tpu_custom_call.1} parent=11 // pred_fallthru
        _
      // Predicated region
      $region25: #{tpu_custom_call.1} parent=11 // pred_check
        %p215 = pneg %p123
      $region26: #{tpu_custom_call.1} parent=11 // pred_check_branch
        %217 = sbr.rel (%p215) target = $region28
      $region27: #{tpu_custom_call.1} parent=11 // pred_region
        _
      $region28: #{tpu_custom_call.1} parent=11 // pred_fallthru
        _
      // Predicated region
      $region29: #{tpu_custom_call.1} parent=11 // pred_check
        %p218 = pneg %p144
      $region30: #{tpu_custom_call.1} parent=11 // pred_check_branch
        %220 = sbr.rel (%p218) target = $region32
      $region31: #{tpu_custom_call.1} parent=11 // pred_region
        _
      $region32: #{tpu_custom_call.1} parent=11 // pred_fallthru
        _
      // Predicated region
      $region33: #{tpu_custom_call.1} parent=11 // pred_check
        %p221 = pneg %p165
      $region34: #{tpu_custom_call.1} parent=11 // pred_check_branch
        %223 = sbr.rel (%p221) target = $region36
      $region35: #{tpu_custom_call.1} parent=11 // pred_region
        _
      $region36: #{tpu_custom_call.1} parent=11 // pred_fallthru
        _
    $region12: #{tpu_custom_call.1} parent=5 // pred_fallthru
      _
    %p224 = scmp.lt.s32.totalorder %s13, 2
    // Predicated region
    $region37: #{tpu_custom_call.1} parent=5 // pred_check
      %p225 = pneg %p224
    $region38: #{tpu_custom_call.1} parent=5 // pred_check_branch
      %227 = sbr.rel (%p225) target = $region40
    $region39: #{tpu_custom_call.1} parent=5 // pred_region
      // Predicated region
      $region41: #{tpu_custom_call.1} parent=39 // pred_check
        %p228 = pneg %p33
      $region42: #{tpu_custom_call.1} parent=39 // pred_check_branch
        %230 = sbr.rel (%p228) target = $region44
      $region43: #{tpu_custom_call.1} parent=39 // pred_region
        %s231 = smul.u32 16, %s13
        %p232 = scmp.lt.s32.totalorder %s231, 31
        %s233 = scalar_select %p232, %s231, 31
        %s234 = smul.addr %s233, 8
        %s235 = scalar_lea.vmem %s0, %s234
        %s236 = smul.u32 16, %s13
      $region44: #{tpu_custom_call.1} parent=39 // pred_fallthru
        _
    $region40: #{tpu_custom_call.1} parent=5 // pred_fallthru
      _
    %p237 = scmp.le.s32.totalorder 1, %s13
    %p238 = scmp.lt.s32.totalorder %s13, 3
    %p239 = pnand %p237, %p238
    %p240 = pneg %p239
    // Predicated region
    $region45: #{tpu_custom_call.1} parent=5 // pred_check
      _
    $region46: #{tpu_custom_call.1} parent=5 // pred_check_branch
      %242 = sbr.rel (%p239) target = $region48
    $region47: #{tpu_custom_call.1} parent=5 // pred_region
      %s243 = ssub.s32 %s13, 1
      %s244 = smul.u32 16, %s18
      %p245 = scmp.lt.s32.totalorder %s244, 31
      %s246 = scalar_select %p245, %s244, 31
      %s247 = smul.addr %s246, 8
      %s248 = scalar_lea.vmem %s0, %s247
      %p249 = pneg %p39
      %p250 = pneg %p36
      %p251 = pneg %p60
      %p252 = pneg %p57
      %p253 = pneg %p81
      %p254 = pneg %p78
      %p255 = pneg %p102
      %p256 = pneg %p99
      %p257 = pneg %p123
      %p258 = pneg %p120
      %p259 = pneg %p144
      %p260 = pneg %p141
      %p261 = pneg %p165
      %p262 = pneg %p162
      %p263 = pneg %p191
      %p264 = pneg %p188
      %s265 = smul.u32 16, %s18
      %p266 = scmp.lt.s32.totalorder %s265, 31
      %s267 = scalar_select %p266, %s265, 31
      %s268 = smul.addr %s267, 8
      %s269 = scalar_lea.vmem %s7, %s268
      %s270 = smul.u32 16, %s18
      %p271 = scmp.lt.s32.totalorder %s270, 31
      %s272 = scalar_select %p271, %s270, 31
      %s273 = smul.addr %s272, 8
      %s274 = scalar_lea.vmem %s0, %s273
      %s275 = smul.u32 16, %s18
      %s276 = smul.u32 16, %s18
      %p277 = scmp.lt.s32.totalorder %s276, 31
      %s278 = scalar_select %p277, %s276, 31
      %s279 = smul.addr %s278, 8
      %s280 = scalar_lea.vmem %s7, %s279
      %s281 = smul.u32 16, %s18
      %v282 = vld [vmem:[%s274] sm:$0xff]
      %v283 = vld [vmem:[%s274 + $0x8] sm:$0xff]
      %v284 = vld [vmem:[%s274 + $0x10] sm:$0xff]
      %v285 = vld [vmem:[%s274 + $0x18] sm:$0xff]
      %v286 = vld [vmem:[%s274 + $0x20] sm:$0xff]
      %v287 = vld [vmem:[%s274 + $0x28] sm:$0xff]
      %v288 = vld [vmem:[%s274 + $0x30] sm:$0xff]
      %v289 = vld [vmem:[%s274 + $0x38] sm:$0xff]
      %v290 = vld [vmem:[%s274 + $0x40] sm:$0xff]
      %v291 = vld [vmem:[%s274 + $0x48] sm:$0xff]
      %v292 = vld [vmem:[%s274 + $0x50] sm:$0xff]
      %v293 = vld [vmem:[%s274 + $0x58] sm:$0xff]
      %v294 = vld [vmem:[%s274 + $0x60] sm:$0xff]
      %v295 = vld [vmem:[%s274 + $0x68] sm:$0xff]
      %v296 = vld [vmem:[%s274 + $0x70] sm:$0xff]
      %v297 = vld [vmem:[%s274 + $0x78] sm:$0xff]
      %v298 = vld [vmem:[%s1] sm:$0xff]
      %v299 = vld [vmem:[%s1 + $0x8] sm:$0xff]
      %v300 = vld [vmem:[%s1 + $0x10] sm:$0xff]
      %v301 = vld [vmem:[%s1 + $0x18] sm:$0xff]
      %v302 = vld [vmem:[%s1 + $0x20] sm:$0xff]
      %v303 = vld [vmem:[%s1 + $0x28] sm:$0xff]
      %v304 = vld [vmem:[%s1 + $0x30] sm:$0x1f]
      %v305 = vld [vmem:[%s2] sm:$0x1]
      %v307 = vperm.slane %v305, 0
      %vm309 = vcmask 433152
      %v311 = vsel %vm309, %v282, 0
      %v314 = vsel %vm309, %v283, 0
      %v317 = vsel %vm309, %v284, 0
      %v320 = vsel %vm309, %v285, 0
      %v323 = vsel %vm309, %v286, 0
      %v326 = vsel %vm309, %v287, 0
      %v329 = vsel %vm309, %v288, 0
      %v332 = vsel %vm309, %v289, 0
      %v335 = vsel %vm309, %v290, 0
      %v338 = vsel %vm309, %v291, 0
      %v341 = vsel %vm309, %v292, 0
      %v344 = vsel %vm309, %v293, 0
      %v347 = vsel %vm309, %v294, 0
      %v350 = vsel %vm309, %v295, 0
      %v353 = vsel %vm309, %v296, 0
      %v356 = vsel %vm309, %v297, 0
      %vm358 = vcmask 1044480
      %v360 = vsel %vm358, %v304, 0
      %362 = vmatpush.msra.mxu0 0.0
      %363 = vmatpush.msra.mxu0 0.0
      %364 = vmatpush.msra.mxu0 0.0
      %365 = vmatpush.msra.mxu0 0.0
      %366 = vmatpush.msra.mxu0 0.0
      %367 = vmatpush.msra.mxu0 0.0
      %368 = vmatpush.msra.mxu0 0.0
      %369 = vmatpush.msra.mxu0 0.0
      %370 = vmatpush.msra.mxu0 0.0
      %v371 = vand.u32 %v360, 4294901760
      %372 = vmatpush.msra.mxu0 %v371
      %v373 = vand.u32 %v303, 4294901760
      %374 = vmatpush.msra.mxu0 %v373
      %v375 = vand.u32 %v302, 4294901760
      %376 = vmatpush.msra.mxu0 %v375
      %v377 = vand.u32 %v301, 4294901760
      %378 = vmatpush.msra.mxu0 %v377
      %v379 = vand.u32 %v300, 4294901760
      %380 = vmatpush.msra.mxu0 %v379
      %v381 = vand.u32 %v299, 4294901760
      %382 = vmatpush.msra.mxu0 %v381
      %v383 = vand.u32 %v298, 4294901760
      %384 = vmatpush.msra.mxu0 %v383
      %v385 = vand.u32 %v311, 4294901760
      %v386 = vsub.f32 %v311, %v385
      %v387 = vand.u32 %v386, 4294901760
      %v388 = vsub.f32 %v386, %v387
      %v389 = vand.u32 %v388, 4294901760
      %390 = vmatmul.f32.gmra.mxu0 %v389
      %v391 = vpop.f32.mrf.mxu0
      %v392 = vadd.f32 %v307, %v391
      %v393 = vand.u32 %v314, 4294901760
      %v394 = vsub.f32 %v314, %v393
      %v395 = vand.u32 %v394, 4294901760
      %v396 = vsub.f32 %v394, %v395
      %v397 = vand.u32 %v396, 4294901760
      %398 = vmatmul.f32.gmra.mxu0 %v397
      %v399 = vpop.f32.mrf.mxu0
      %v400 = vadd.f32 %v307, %v399
      %v401 = vand.u32 %v317, 4294901760
      %v402 = vsub.f32 %v317, %v401
      %v403 = vand.u32 %v402, 4294901760
      %v404 = vsub.f32 %v402, %v403
      %v405 = vand.u32 %v404, 4294901760
      %406 = vmatmul.f32.gmra.mxu0 %v405
      %v407 = vpop.f32.mrf.mxu0
      %v408 = vadd.f32 %v307, %v407
      %v409 = vand.u32 %v320, 4294901760
      %v410 = vsub.f32 %v320, %v409
      %v411 = vand.u32 %v410, 4294901760
      %v412 = vsub.f32 %v410, %v411
      %v413 = vand.u32 %v412, 4294901760
      %414 = vmatmul.f32.gmra.mxu0 %v413
      %v415 = vpop.f32.mrf.mxu0
      %v416 = vadd.f32 %v307, %v415
      %v417 = vand.u32 %v323, 4294901760
      %v418 = vsub.f32 %v323, %v417
      %v419 = vand.u32 %v418, 4294901760
      %v420 = vsub.f32 %v418, %v419
      %v421 = vand.u32 %v420, 4294901760
      %422 = vmatmul.f32.gmra.mxu0 %v421
      %v423 = vpop.f32.mrf.mxu0
      %v424 = vadd.f32 %v307, %v423
      %v425 = vand.u32 %v326, 4294901760
      %v426 = vsub.f32 %v326, %v425
      %v427 = vand.u32 %v426, 4294901760
      %v428 = vsub.f32 %v426, %v427
      %v429 = vand.u32 %v428, 4294901760
      %430 = vmatmul.f32.gmra.mxu0 %v429
      %v431 = vpop.f32.mrf.mxu0
      %v432 = vadd.f32 %v307, %v431
      %v433 = vand.u32 %v329, 4294901760
      %v434 = vsub.f32 %v329, %v433
      %v435 = vand.u32 %v434, 4294901760
      %v436 = vsub.f32 %v434, %v435
      %v437 = vand.u32 %v436, 4294901760
      %438 = vmatmul.f32.gmra.mxu0 %v437
      %v439 = vpop.f32.mrf.mxu0
      %v440 = vadd.f32 %v307, %v439
      %v441 = vand.u32 %v332, 4294901760
      %v442 = vsub.f32 %v332, %v441
      %v443 = vand.u32 %v442, 4294901760
      %v444 = vsub.f32 %v442, %v443
      %v445 = vand.u32 %v444, 4294901760
      %446 = vmatmul.f32.gmra.mxu0 %v445
      %v447 = vpop.f32.mrf.mxu0
      %v448 = vadd.f32 %v307, %v447
      %v449 = vand.u32 %v335, 4294901760
      %v450 = vsub.f32 %v335, %v449
      %v451 = vand.u32 %v450, 4294901760
      %v452 = vsub.f32 %v450, %v451
      %v453 = vand.u32 %v452, 4294901760
      %454 = vmatmul.f32.gmra.mxu0 %v453
      %v455 = vpop.f32.mrf.mxu0
      %v456 = vadd.f32 %v307, %v455
      %v457 = vand.u32 %v338, 4294901760
      %v458 = vsub.f32 %v338, %v457
      %v459 = vand.u32 %v458, 4294901760
      %v460 = vsub.f32 %v458, %v459
      %v461 = vand.u32 %v460, 4294901760
      %462 = vmatmul.f32.gmra.mxu0 %v461
      %v463 = vpop.f32.mrf.mxu0
      %v464 = vadd.f32 %v307, %v463
      %v465 = vand.u32 %v341, 4294901760
      %v466 = vsub.f32 %v341, %v465
      %v467 = vand.u32 %v466, 4294901760
      %v468 = vsub.f32 %v466, %v467
      %v469 = vand.u32 %v468, 4294901760
      %470 = vmatmul.f32.gmra.mxu0 %v469
      %v471 = vpop.f32.mrf.mxu0
      %v472 = vadd.f32 %v307, %v471
      %v473 = vand.u32 %v344, 4294901760
      %v474 = vsub.f32 %v344, %v473
      %v475 = vand.u32 %v474, 4294901760
      %v476 = vsub.f32 %v474, %v475
      %v477 = vand.u32 %v476, 4294901760
      %478 = vmatmul.f32.gmra.mxu0 %v477
      %v479 = vpop.f32.mrf.mxu0
      %v480 = vadd.f32 %v307, %v479
      %v481 = vand.u32 %v347, 4294901760
      %v482 = vsub.f32 %v347, %v481
      %v483 = vand.u32 %v482, 4294901760
      %v484 = vsub.f32 %v482, %v483
      %v485 = vand.u32 %v484, 4294901760
      %486 = vmatmul.f32.gmra.mxu0 %v485
      %v487 = vpop.f32.mrf.mxu0
      %v488 = vadd.f32 %v307, %v487
      %v489 = vand.u32 %v350, 4294901760
      %v490 = vsub.f32 %v350, %v489
      %v491 = vand.u32 %v490, 4294901760
      %v492 = vsub.f32 %v490, %v491
      %v493 = vand.u32 %v492, 4294901760
      %494 = vmatmul.f32.gmra.mxu0 %v493
      %v495 = vpop.f32.mrf.mxu0
      %v496 = vadd.f32 %v307, %v495
      %v497 = vand.u32 %v353, 4294901760
      %v498 = vsub.f32 %v353, %v497
      %v499 = vand.u32 %v498, 4294901760
      %v500 = vsub.f32 %v498, %v499
      %v501 = vand.u32 %v500, 4294901760
      %502 = vmatmul.f32.gmra.mxu0 %v501
      %v503 = vpop.f32.mrf.mxu0
      %v504 = vadd.f32 %v307, %v503
      %v505 = vand.u32 %v356, 4294901760
      %v506 = vsub.f32 %v356, %v505
      %v507 = vand.u32 %v506, 4294901760
      %v508 = vsub.f32 %v506, %v507
      %v509 = vand.u32 %v508, 4294901760
      %510 = vmatmul.f32.gmra.mxu0 %v509
      %v511 = vpop.f32.mrf.mxu0
      %v512 = vadd.f32 %v307, %v511
      %513 = vdwg.mxu0
      %514 = vmatpush.msra.mxu0 0.0
      %515 = vmatpush.msra.mxu0 0.0
      %516 = vmatpush.msra.mxu0 0.0
      %517 = vmatpush.msra.mxu0 0.0
      %518 = vmatpush.msra.mxu0 0.0
      %519 = vmatpush.msra.mxu0 0.0
      %520 = vmatpush.msra.mxu0 0.0
      %521 = vmatpush.msra.mxu0 0.0
      %522 = vmatpush.msra.mxu0 0.0
      %v523 = vand.u32 %v360, 4294901760
      %v524 = vsub.f32 %v360, %v523
      %v525 = vand.u32 %v524, 4294901760
      %v526 = vsub.f32 %v524, %v525
      %v527 = vand.u32 %v526, 4294901760
      %528 = vmatpush.msra.mxu0 %v527
      %v529 = vand.u32 %v303, 4294901760
      %v530 = vsub.f32 %v303, %v529
      %v531 = vand.u32 %v530, 4294901760
      %v532 = vsub.f32 %v530, %v531
      %v533 = vand.u32 %v532, 4294901760
      %534 = vmatpush.msra.mxu0 %v533
      %v535 = vand.u32 %v302, 4294901760
      %v536 = vsub.f32 %v302, %v535
      %v537 = vand.u32 %v536, 4294901760
      %v538 = vsub.f32 %v536, %v537
      %v539 = vand.u32 %v538, 4294901760
      %540 = vmatpush.msra.mxu0 %v539
      %v541 = vand.u32 %v301, 4294901760
      %v542 = vsub.f32 %v301, %v541
      %v543 = vand.u32 %v542, 4294901760
      %v544 = vsub.f32 %v542, %v543
      %v545 = vand.u32 %v544, 4294901760
      %546 = vmatpush.msra.mxu0 %v545
      %v547 = vand.u32 %v300, 4294901760
      %v548 = vsub.f32 %v300, %v547
      %v549 = vand.u32 %v548, 4294901760
      %v550 = vsub.f32 %v548, %v549
      %v551 = vand.u32 %v550, 4294901760
      %552 = vmatpush.msra.mxu0 %v551
      %v553 = vand.u32 %v299, 4294901760
      %v554 = vsub.f32 %v299, %v553
      %v555 = vand.u32 %v554, 4294901760
      %v556 = vsub.f32 %v554, %v555
      %v557 = vand.u32 %v556, 4294901760
      %558 = vmatpush.msra.mxu0 %v557
      %v559 = vand.u32 %v298, 4294901760
      %v560 = vsub.f32 %v298, %v559
      %v561 = vand.u32 %v560, 4294901760
      %v562 = vsub.f32 %v560, %v561
      %v563 = vand.u32 %v562, 4294901760
      %564 = vmatpush.msra.mxu0 %v563
      %v565 = vand.u32 %v311, 4294901760
      %566 = vmatmul.f32.gmra.mxu0 %v565
      %v567 = vpop.f32.mrf.mxu0
      %v568 = vadd.f32 %v392, %v567
      %v569 = vand.u32 %v314, 4294901760
      %570 = vmatmul.f32.gmra.mxu0 %v569
      %v571 = vpop.f32.mrf.mxu0
      %v572 = vadd.f32 %v400, %v571
      %v573 = vand.u32 %v317, 4294901760
      %574 = vmatmul.f32.gmra.mxu0 %v573
      %v575 = vpop.f32.mrf.mxu0
      %v576 = vadd.f32 %v408, %v575
      %v577 = vand.u32 %v320, 4294901760
      %578 = vmatmul.f32.gmra.mxu0 %v577
      %v579 = vpop.f32.mrf.mxu0
      %v580 = vadd.f32 %v416, %v579
      %v581 = vand.u32 %v323, 4294901760
      %582 = vmatmul.f32.gmra.mxu0 %v581
      %v583 = vpop.f32.mrf.mxu0
      %v584 = vadd.f32 %v424, %v583
      %v585 = vand.u32 %v326, 4294901760
      %586 = vmatmul.f32.gmra.mxu0 %v585
      %v587 = vpop.f32.mrf.mxu0
      %v588 = vadd.f32 %v432, %v587
      %v589 = vand.u32 %v329, 4294901760
      %590 = vmatmul.f32.gmra.mxu0 %v589
      %v591 = vpop.f32.mrf.mxu0
      %v592 = vadd.f32 %v440, %v591
      %v593 = vand.u32 %v332, 4294901760
      %594 = vmatmul.f32.gmra.mxu0 %v593
      %v595 = vpop.f32.mrf.mxu0
      %v596 = vadd.f32 %v448, %v595
      %v597 = vand.u32 %v335, 4294901760
      %598 = vmatmul.f32.gmra.mxu0 %v597
      %v599 = vpop.f32.mrf.mxu0
      %v600 = vadd.f32 %v456, %v599
      %v601 = vand.u32 %v338, 4294901760
      %602 = vmatmul.f32.gmra.mxu0 %v601
      %v603 = vpop.f32.mrf.mxu0
      %v604 = vadd.f32 %v464, %v603
      %v605 = vand.u32 %v341, 4294901760
      %606 = vmatmul.f32.gmra.mxu0 %v605
      %v607 = vpop.f32.mrf.mxu0
      %v608 = vadd.f32 %v472, %v607
      %v609 = vand.u32 %v344, 4294901760
      %610 = vmatmul.f32.gmra.mxu0 %v609
      %v611 = vpop.f32.mrf.mxu0
      %v612 = vadd.f32 %v480, %v611
      %v613 = vand.u32 %v347, 4294901760
      %614 = vmatmul.f32.gmra.mxu0 %v613
      %v615 = vpop.f32.mrf.mxu0
      %v616 = vadd.f32 %v488, %v615
      %v617 = vand.u32 %v350, 4294901760
      %618 = vmatmul.f32.gmra.mxu0 %v617
      %v619 = vpop.f32.mrf.mxu0
      %v620 = vadd.f32 %v496, %v619
      %v621 = vand.u32 %v353, 4294901760
      %622 = vmatmul.f32.gmra.mxu0 %v621
      %v623 = vpop.f32.mrf.mxu0
      %v624 = vadd.f32 %v504, %v623
      %v625 = vand.u32 %v356, 4294901760
      %626 = vmatmul.f32.gmra.mxu0 %v625
      %v627 = vpop.f32.mrf.mxu0
      %v628 = vadd.f32 %v512, %v627
      %629 = vdwg.mxu0
      %630 = vmatpush.msra.mxu0 0.0
      %631 = vmatpush.msra.mxu0 0.0
      %632 = vmatpush.msra.mxu0 0.0
      %633 = vmatpush.msra.mxu0 0.0
      %634 = vmatpush.msra.mxu0 0.0
      %635 = vmatpush.msra.mxu0 0.0
      %636 = vmatpush.msra.mxu0 0.0
      %637 = vmatpush.msra.mxu0 0.0
      %638 = vmatpush.msra.mxu0 0.0
      %v639 = vand.u32 %v360, 4294901760
      %v640 = vsub.f32 %v360, %v639
      %641 = vmatpush.msra.mxu0 %v640
      %v642 = vand.u32 %v303, 4294901760
      %v643 = vsub.f32 %v303, %v642
      %644 = vmatpush.msra.mxu0 %v643
      %v645 = vand.u32 %v302, 4294901760
      %v646 = vsub.f32 %v302, %v645
      %647 = vmatpush.msra.mxu0 %v646
      %v648 = vand.u32 %v301, 4294901760
      %v649 = vsub.f32 %v301, %v648
      %650 = vmatpush.msra.mxu0 %v649
      %v651 = vand.u32 %v300, 4294901760
      %v652 = vsub.f32 %v300, %v651
      %653 = vmatpush.msra.mxu0 %v652
      %v654 = vand.u32 %v299, 4294901760
      %v655 = vsub.f32 %v299, %v654
      %656 = vmatpush.msra.mxu0 %v655
      %v657 = vand.u32 %v298, 4294901760
      %v658 = vsub.f32 %v298, %v657
      %659 = vmatpush.msra.mxu0 %v658
      %v660 = vand.u32 %v311, 4294901760
      %v661 = vsub.f32 %v311, %v660
      %662 = vmatmul.f32.gmra.mxu0 %v661
      %v663 = vpop.f32.mrf.mxu0
      %v664 = vadd.f32 %v568, %v663
      %v665 = vand.u32 %v314, 4294901760
      %v666 = vsub.f32 %v314, %v665
      %667 = vmatmul.f32.gmra.mxu0 %v666
      %v668 = vpop.f32.mrf.mxu0
      %v669 = vadd.f32 %v572, %v668
      %v670 = vand.u32 %v317, 4294901760
      %v671 = vsub.f32 %v317, %v670
      %672 = vmatmul.f32.gmra.mxu0 %v671
      %v673 = vpop.f32.mrf.mxu0
      %v674 = vadd.f32 %v576, %v673
      %v675 = vand.u32 %v320, 4294901760
      %v676 = vsub.f32 %v320, %v675
      %677 = vmatmul.f32.gmra.mxu0 %v676
      %v678 = vpop.f32.mrf.mxu0
      %v679 = vadd.f32 %v580, %v678
      %v680 = vand.u32 %v323, 4294901760
      %v681 = vsub.f32 %v323, %v680
      %682 = vmatmul.f32.gmra.mxu0 %v681
      %v683 = vpop.f32.mrf.mxu0
      %v684 = vadd.f32 %v584, %v683
      %v685 = vand.u32 %v326, 4294901760
      %v686 = vsub.f32 %v326, %v685
      %687 = vmatmul.f32.gmra.mxu0 %v686
      %v688 = vpop.f32.mrf.mxu0
      %v689 = vadd.f32 %v588, %v688
      %v690 = vand.u32 %v329, 4294901760
      %v691 = vsub.f32 %v329, %v690
      %692 = vmatmul.f32.gmra.mxu0 %v691
      %v693 = vpop.f32.mrf.mxu0
      %v694 = vadd.f32 %v592, %v693
      %v695 = vand.u32 %v332, 4294901760
      %v696 = vsub.f32 %v332, %v695
      %697 = vmatmul.f32.gmra.mxu0 %v696
      %v698 = vpop.f32.mrf.mxu0
      %v699 = vadd.f32 %v596, %v698
      %v700 = vand.u32 %v335, 4294901760
      %v701 = vsub.f32 %v335, %v700
      %702 = vmatmul.f32.gmra.mxu0 %v701
      %v703 = vpop.f32.mrf.mxu0
      %v704 = vadd.f32 %v600, %v703
      %v705 = vand.u32 %v338, 4294901760
      %v706 = vsub.f32 %v338, %v705
      %707 = vmatmul.f32.gmra.mxu0 %v706
      %v708 = vpop.f32.mrf.mxu0
      %v709 = vadd.f32 %v604, %v708
      %v710 = vand.u32 %v341, 4294901760
      %v711 = vsub.f32 %v341, %v710
      %712 = vmatmul.f32.gmra.mxu0 %v711
      %v713 = vpop.f32.mrf.mxu0
      %v714 = vadd.f32 %v608, %v713
      %v715 = vand.u32 %v344, 4294901760
      %v716 = vsub.f32 %v344, %v715
      %717 = vmatmul.f32.gmra.mxu0 %v716
      %v718 = vpop.f32.mrf.mxu0
      %v719 = vadd.f32 %v612, %v718
      %v720 = vand.u32 %v347, 4294901760
      %v721 = vsub.f32 %v347, %v720
      %722 = vmatmul.f32.gmra.mxu0 %v721
      %v723 = vpop.f32.mrf.mxu0
      %v724 = vadd.f32 %v616, %v723
      %v725 = vand.u32 %v350, 4294901760
      %v726 = vsub.f32 %v350, %v725
      %727 = vmatmul.f32.gmra.mxu0 %v726
      %v728 = vpop.f32.mrf.mxu0
      %v729 = vadd.f32 %v620, %v728
      %v730 = vand.u32 %v353, 4294901760
      %v731 = vsub.f32 %v353, %v730
      %732 = vmatmul.f32.gmra.mxu0 %v731
      %v733 = vpop.f32.mrf.mxu0
      %v734 = vadd.f32 %v624, %v733
      %v735 = vand.u32 %v356, 4294901760
      %v736 = vsub.f32 %v356, %v735
      %737 = vmatmul.f32.gmra.mxu0 %v736
      %v738 = vpop.f32.mrf.mxu0
      %v739 = vadd.f32 %v628, %v738
      %740 = vdwg.mxu0
      %741 = vmatpush.msra.mxu0 0.0
      %742 = vmatpush.msra.mxu0 0.0
      %743 = vmatpush.msra.mxu0 0.0
      %744 = vmatpush.msra.mxu0 0.0
      %745 = vmatpush.msra.mxu0 0.0
      %746 = vmatpush.msra.mxu0 0.0
      %747 = vmatpush.msra.mxu0 0.0
      %748 = vmatpush.msra.mxu0 0.0
      %749 = vmatpush.msra.mxu0 0.0
      %v750 = vand.u32 %v360, 4294901760
      %751 = vmatpush.msra.mxu0 %v750
      %v752 = vand.u32 %v303, 4294901760
      %753 = vmatpush.msra.mxu0 %v752
      %v754 = vand.u32 %v302, 4294901760
      %755 = vmatpush.msra.mxu0 %v754
      %v756 = vand.u32 %v301, 4294901760
      %757 = vmatpush.msra.mxu0 %v756
      %v758 = vand.u32 %v300, 4294901760
      %759 = vmatpush.msra.mxu0 %v758
      %v760 = vand.u32 %v299, 4294901760
      %761 = vmatpush.msra.mxu0 %v760
      %v762 = vand.u32 %v298, 4294901760
      %763 = vmatpush.msra.mxu0 %v762
      %v764 = vand.u32 %v311, 4294901760
      %v765 = vsub.f32 %v311, %v764
      %v766 = vand.u32 %v765, 4294901760
      %767 = vmatmul.f32.gmra.mxu0 %v766
      %v768 = vpop.f32.mrf.mxu0
      %v769 = vadd.f32 %v664, %v768
      %v770 = vand.u32 %v314, 4294901760
      %v771 = vsub.f32 %v314, %v770
      %v772 = vand.u32 %v771, 4294901760
      %773 = vmatmul.f32.gmra.mxu0 %v772
      %v774 = vpop.f32.mrf.mxu0
      %v775 = vadd.f32 %v669, %v774
      %v776 = vand.u32 %v317, 4294901760
      %v777 = vsub.f32 %v317, %v776
      %v778 = vand.u32 %v777, 4294901760
      %779 = vmatmul.f32.gmra.mxu0 %v778
      %v780 = vpop.f32.mrf.mxu0
      %v781 = vadd.f32 %v674, %v780
      %v782 = vand.u32 %v320, 4294901760
      %v783 = vsub.f32 %v320, %v782
      %v784 = vand.u32 %v783, 4294901760
      %785 = vmatmul.f32.gmra.mxu0 %v784
      %v786 = vpop.f32.mrf.mxu0
      %v787 = vadd.f32 %v679, %v786
      %v788 = vand.u32 %v323, 4294901760
      %v789 = vsub.f32 %v323, %v788
      %v790 = vand.u32 %v789, 4294901760
      %791 = vmatmul.f32.gmra.mxu0 %v790
      %v792 = vpop.f32.mrf.mxu0
      %v793 = vadd.f32 %v684, %v792
      %v794 = vand.u32 %v326, 4294901760
      %v795 = vsub.f32 %v326, %v794
      %v796 = vand.u32 %v795, 4294901760
      %797 = vmatmul.f32.gmra.mxu0 %v796
      %v798 = vpop.f32.mrf.mxu0
      %v799 = vadd.f32 %v689, %v798
      %v800 = vand.u32 %v329, 4294901760
      %v801 = vsub.f32 %v329, %v800
      %v802 = vand.u32 %v801, 4294901760
      %803 = vmatmul.f32.gmra.mxu0 %v802
      %v804 = vpop.f32.mrf.mxu0
      %v805 = vadd.f32 %v694, %v804
      %v806 = vand.u32 %v332, 4294901760
      %v807 = vsub.f32 %v332, %v806
      %v808 = vand.u32 %v807, 4294901760
      %809 = vmatmul.f32.gmra.mxu0 %v808
      %v810 = vpop.f32.mrf.mxu0
      %v811 = vadd.f32 %v699, %v810
      %v812 = vand.u32 %v335, 4294901760
      %v813 = vsub.f32 %v335, %v812
      %v814 = vand.u32 %v813, 4294901760
      %815 = vmatmul.f32.gmra.mxu0 %v814
      %v816 = vpop.f32.mrf.mxu0
      %v817 = vadd.f32 %v704, %v816
      %v818 = vand.u32 %v338, 4294901760
      %v819 = vsub.f32 %v338, %v818
      %v820 = vand.u32 %v819, 4294901760
      %821 = vmatmul.f32.gmra.mxu0 %v820
      %v822 = vpop.f32.mrf.mxu0
      %v823 = vadd.f32 %v709, %v822
      %v824 = vand.u32 %v341, 4294901760
      %v825 = vsub.f32 %v341, %v824
      %v826 = vand.u32 %v825, 4294901760
      %827 = vmatmul.f32.gmra.mxu0 %v826
      %v828 = vpop.f32.mrf.mxu0
      %v829 = vadd.f32 %v714, %v828
      %v830 = vand.u32 %v344, 4294901760
      %v831 = vsub.f32 %v344, %v830
      %v832 = vand.u32 %v831, 4294901760
      %833 = vmatmul.f32.gmra.mxu0 %v832
      %v834 = vpop.f32.mrf.mxu0
      %v835 = vadd.f32 %v719, %v834
      %v836 = vand.u32 %v347, 4294901760
      %v837 = vsub.f32 %v347, %v836
      %v838 = vand.u32 %v837, 4294901760
      %839 = vmatmul.f32.gmra.mxu0 %v838
      %v840 = vpop.f32.mrf.mxu0
      %v841 = vadd.f32 %v724, %v840
      %v842 = vand.u32 %v350, 4294901760
      %v843 = vsub.f32 %v350, %v842
      %v844 = vand.u32 %v843, 4294901760
      %845 = vmatmul.f32.gmra.mxu0 %v844
      %v846 = vpop.f32.mrf.mxu0
      %v847 = vadd.f32 %v729, %v846
      %v848 = vand.u32 %v353, 4294901760
      %v849 = vsub.f32 %v353, %v848
      %v850 = vand.u32 %v849, 4294901760
      %851 = vmatmul.f32.gmra.mxu0 %v850
      %v852 = vpop.f32.mrf.mxu0
      %v853 = vadd.f32 %v734, %v852
      %v854 = vand.u32 %v356, 4294901760
      %v855 = vsub.f32 %v356, %v854
      %v856 = vand.u32 %v855, 4294901760
      %857 = vmatmul.f32.gmra.mxu0 %v856
      %v858 = vpop.f32.mrf.mxu0
      %v859 = vadd.f32 %v739, %v858
      %860 = vdwg.mxu0
      %861 = vmatpush.msra.mxu0 0.0
      %862 = vmatpush.msra.mxu0 0.0
      %863 = vmatpush.msra.mxu0 0.0
      %864 = vmatpush.msra.mxu0 0.0
      %865 = vmatpush.msra.mxu0 0.0
      %866 = vmatpush.msra.mxu0 0.0
      %867 = vmatpush.msra.mxu0 0.0
      %868 = vmatpush.msra.mxu0 0.0
      %869 = vmatpush.msra.mxu0 0.0
      %v870 = vand.u32 %v360, 4294901760
      %v871 = vsub.f32 %v360, %v870
      %v872 = vand.u32 %v871, 4294901760
      %873 = vmatpush.msra.mxu0 %v872
      %v874 = vand.u32 %v303, 4294901760
      %v875 = vsub.f32 %v303, %v874
      %v876 = vand.u32 %v875, 4294901760
      %877 = vmatpush.msra.mxu0 %v876
      %v878 = vand.u32 %v302, 4294901760
      %v879 = vsub.f32 %v302, %v878
      %v880 = vand.u32 %v879, 4294901760
      %881 = vmatpush.msra.mxu0 %v880
      %v882 = vand.u32 %v301, 4294901760
      %v883 = vsub.f32 %v301, %v882
      %v884 = vand.u32 %v883, 4294901760
      %885 = vmatpush.msra.mxu0 %v884
      %v886 = vand.u32 %v300, 4294901760
      %v887 = vsub.f32 %v300, %v886
      %v888 = vand.u32 %v887, 4294901760
      %889 = vmatpush.msra.mxu0 %v888
      %v890 = vand.u32 %v299, 4294901760
      %v891 = vsub.f32 %v299, %v890
      %v892 = vand.u32 %v891, 4294901760
      %893 = vmatpush.msra.mxu0 %v892
      %v894 = vand.u32 %v298, 4294901760
      %v895 = vsub.f32 %v298, %v894
      %v896 = vand.u32 %v895, 4294901760
      %897 = vmatpush.msra.mxu0 %v896
      %v898 = vand.u32 %v311, 4294901760
      %899 = vmatmul.f32.gmra.mxu0 %v898
      %v900 = vpop.f32.mrf.mxu0
      %v901 = vadd.f32 %v769, %v900
      %v902 = vand.u32 %v314, 4294901760
      %903 = vmatmul.f32.gmra.mxu0 %v902
      %v904 = vpop.f32.mrf.mxu0
      %v905 = vadd.f32 %v775, %v904
      %v906 = vand.u32 %v317, 4294901760
      %907 = vmatmul.f32.gmra.mxu0 %v906
      %v908 = vpop.f32.mrf.mxu0
      %v909 = vadd.f32 %v781, %v908
      %v910 = vand.u32 %v320, 4294901760
      %911 = vmatmul.f32.gmra.mxu0 %v910
      %v912 = vpop.f32.mrf.mxu0
      %v913 = vadd.f32 %v787, %v912
      %v914 = vand.u32 %v323, 4294901760
      %915 = vmatmul.f32.gmra.mxu0 %v914
      %v916 = vpop.f32.mrf.mxu0
      %v917 = vadd.f32 %v793, %v916
      %v918 = vand.u32 %v326, 4294901760
      %919 = vmatmul.f32.gmra.mxu0 %v918
      %v920 = vpop.f32.mrf.mxu0
      %v921 = vadd.f32 %v799, %v920
      %v922 = vand.u32 %v329, 4294901760
      %923 = vmatmul.f32.gmra.mxu0 %v922
      %v924 = vpop.f32.mrf.mxu0
      %v925 = vadd.f32 %v805, %v924
      %v926 = vand.u32 %v332, 4294901760
      %927 = vmatmul.f32.gmra.mxu0 %v926
      %v928 = vpop.f32.mrf.mxu0
      %v929 = vadd.f32 %v811, %v928
      %v930 = vand.u32 %v335, 4294901760
      %931 = vmatmul.f32.gmra.mxu0 %v930
      %v932 = vpop.f32.mrf.mxu0
      %v933 = vadd.f32 %v817, %v932
      %v934 = vand.u32 %v338, 4294901760
      %935 = vmatmul.f32.gmra.mxu0 %v934
      %v936 = vpop.f32.mrf.mxu0
      %v937 = vadd.f32 %v823, %v936
      %v938 = vand.u32 %v341, 4294901760
      %939 = vmatmul.f32.gmra.mxu0 %v938
      %v940 = vpop.f32.mrf.mxu0
      %v941 = vadd.f32 %v829, %v940
      %v942 = vand.u32 %v344, 4294901760
      %943 = vmatmul.f32.gmra.mxu0 %v942
      %v944 = vpop.f32.mrf.mxu0
      %v945 = vadd.f32 %v835, %v944
      %v946 = vand.u32 %v347, 4294901760
      %947 = vmatmul.f32.gmra.mxu0 %v946
      %v948 = vpop.f32.mrf.mxu0
      %v949 = vadd.f32 %v841, %v948
      %v950 = vand.u32 %v350, 4294901760
      %951 = vmatmul.f32.gmra.mxu0 %v950
      %v952 = vpop.f32.mrf.mxu0
      %v953 = vadd.f32 %v847, %v952
      %v954 = vand.u32 %v353, 4294901760
      %955 = vmatmul.f32.gmra.mxu0 %v954
      %v956 = vpop.f32.mrf.mxu0
      %v957 = vadd.f32 %v853, %v956
      %v958 = vand.u32 %v356, 4294901760
      %959 = vmatmul.f32.gmra.mxu0 %v958
      %v960 = vpop.f32.mrf.mxu0
      %v961 = vadd.f32 %v859, %v960
      %962 = vdwg.mxu0
      %963 = vmatpush.msra.mxu0 0.0
      %964 = vmatpush.msra.mxu0 0.0
      %965 = vmatpush.msra.mxu0 0.0
      %966 = vmatpush.msra.mxu0 0.0
      %967 = vmatpush.msra.mxu0 0.0
      %968 = vmatpush.msra.mxu0 0.0
      %969 = vmatpush.msra.mxu0 0.0
      %970 = vmatpush.msra.mxu0 0.0
      %971 = vmatpush.msra.mxu0 0.0
      %v972 = vand.u32 %v360, 4294901760
      %973 = vmatpush.msra.mxu0 %v972
      %v974 = vand.u32 %v303, 4294901760
      %975 = vmatpush.msra.mxu0 %v974
      %v976 = vand.u32 %v302, 4294901760
      %977 = vmatpush.msra.mxu0 %v976
      %v978 = vand.u32 %v301, 4294901760
      %979 = vmatpush.msra.mxu0 %v978
      %v980 = vand.u32 %v300, 4294901760
      %981 = vmatpush.msra.mxu0 %v980
      %v982 = vand.u32 %v299, 4294901760
      %983 = vmatpush.msra.mxu0 %v982
      %v984 = vand.u32 %v298, 4294901760
      %985 = vmatpush.msra.mxu0 %v984
      %v986 = vand.u32 %v311, 4294901760
      %987 = vmatmul.f32.gmra.mxu0 %v986
      %v988 = vpop.f32.mrf.mxu0
      %v989 = vadd.f32 %v901, %v988
      %v990 = vand.u32 %v314, 4294901760
      %991 = vmatmul.f32.gmra.mxu0 %v990
      %v992 = vpop.f32.mrf.mxu0
      %v993 = vadd.f32 %v905, %v992
      %v994 = vand.u32 %v317, 4294901760
      %995 = vmatmul.f32.gmra.mxu0 %v994
      %v996 = vpop.f32.mrf.mxu0
      %v997 = vadd.f32 %v909, %v996
      %v998 = vand.u32 %v320, 4294901760
      %999 = vmatmul.f32.gmra.mxu0 %v998
      %v1000 = vpop.f32.mrf.mxu0
      %v1001 = vadd.f32 %v913, %v1000
      %v1002 = vand.u32 %v323, 4294901760
      %1003 = vmatmul.f32.gmra.mxu0 %v1002
      %v1004 = vpop.f32.mrf.mxu0
      %v1005 = vadd.f32 %v917, %v1004
      %v1006 = vand.u32 %v326, 4294901760
      %1007 = vmatmul.f32.gmra.mxu0 %v1006
      %v1008 = vpop.f32.mrf.mxu0
      %v1009 = vadd.f32 %v921, %v1008
      %v1010 = vand.u32 %v329, 4294901760
      %1011 = vmatmul.f32.gmra.mxu0 %v1010
      %v1012 = vpop.f32.mrf.mxu0
      %v1013 = vadd.f32 %v925, %v1012
      %v1014 = vand.u32 %v332, 4294901760
      %1015 = vmatmul.f32.gmra.mxu0 %v1014
      %v1016 = vpop.f32.mrf.mxu0
      %v1017 = vadd.f32 %v929, %v1016
      %v1018 = vand.u32 %v335, 4294901760
      %1019 = vmatmul.f32.gmra.mxu0 %v1018
      %v1020 = vpop.f32.mrf.mxu0
      %v1021 = vadd.f32 %v933, %v1020
      %v1022 = vand.u32 %v338, 4294901760
      %1023 = vmatmul.f32.gmra.mxu0 %v1022
      %v1024 = vpop.f32.mrf.mxu0
      %v1025 = vadd.f32 %v937, %v1024
      %v1026 = vand.u32 %v341, 4294901760
      %1027 = vmatmul.f32.gmra.mxu0 %v1026
      %v1028 = vpop.f32.mrf.mxu0
      %v1029 = vadd.f32 %v941, %v1028
      %v1030 = vand.u32 %v344, 4294901760
      %1031 = vmatmul.f32.gmra.mxu0 %v1030
      %v1032 = vpop.f32.mrf.mxu0
      %v1033 = vadd.f32 %v945, %v1032
      %v1034 = vand.u32 %v347, 4294901760
      %1035 = vmatmul.f32.gmra.mxu0 %v1034
      %v1036 = vpop.f32.mrf.mxu0
      %v1037 = vadd.f32 %v949, %v1036
      %v1038 = vand.u32 %v350, 4294901760
      %1039 = vmatmul.f32.gmra.mxu0 %v1038
      %v1040 = vpop.f32.mrf.mxu0
      %v1041 = vadd.f32 %v953, %v1040
      %v1042 = vand.u32 %v353, 4294901760
      %1043 = vmatmul.f32.gmra.mxu0 %v1042
      %v1044 = vpop.f32.mrf.mxu0
      %v1045 = vadd.f32 %v957, %v1044
      %v1046 = vand.u32 %v356, 4294901760
      %1047 = vmatmul.f32.gmra.mxu0 %v1046
      %v1048 = vpop.f32.mrf.mxu0
      %v1049 = vadd.f32 %v961, %v1048
      %1050 = vdwg.mxu0
      %v1051 = vmax.f32 %v989, 0.0
      %v1052 = vmax.f32 %v993, 0.0
      %v1053 = vmax.f32 %v997, 0.0
      %v1054 = vmax.f32 %v1001, 0.0
      %v1055 = vmax.f32 %v1005, 0.0
      %v1056 = vmax.f32 %v1009, 0.0
      %v1057 = vmax.f32 %v1013, 0.0
      %v1058 = vmax.f32 %v1017, 0.0
      %v1059 = vmax.f32 %v1021, 0.0
      %v1060 = vmax.f32 %v1025, 0.0
      %v1061 = vmax.f32 %v1029, 0.0
      %v1062 = vmax.f32 %v1033, 0.0
      %v1063 = vmax.f32 %v1037, 0.0
      %v1064 = vmax.f32 %v1041, 0.0
      %v1065 = vmax.f32 %v1045, 0.0
      %v1066 = vmax.f32 %v1049, 0.0
      %v1067 = vld [vmem:[%s3] sm:$0xff]
      %v1068 = vld [vmem:[%s3 + $0x8] sm:$0xff]
      %v1069 = vld [vmem:[%s3 + $0x10] sm:$0xff]
      %v1070 = vld [vmem:[%s3 + $0x18] sm:$0xff]
      %v1071 = vld [vmem:[%s3 + $0x20] sm:$0xff]
      %v1072 = vld [vmem:[%s3 + $0x28] sm:$0xff]
      %v1073 = vld [vmem:[%s3 + $0x30] sm:$0xff]
      %v1074 = vld [vmem:[%s3 + $0x38] sm:$0xff]
      %v1075 = vld [vmem:[%s4] sm:$0x1]
      %v1077 = vperm.slane %v1075, 0
      %vm1079 = vcmask 523264
      %v1081 = vsel %vm1079, %v1051, 0
      %v1084 = vsel %vm1079, %v1052, 0
      %v1087 = vsel %vm1079, %v1053, 0
      %v1090 = vsel %vm1079, %v1054, 0
      %v1093 = vsel %vm1079, %v1055, 0
      %v1096 = vsel %vm1079, %v1056, 0
      %v1099 = vsel %vm1079, %v1057, 0
      %v1102 = vsel %vm1079, %v1058, 0
      %v1105 = vsel %vm1079, %v1059, 0
      %v1108 = vsel %vm1079, %v1060, 0
      %v1111 = vsel %vm1079, %v1061, 0
      %v1114 = vsel %vm1079, %v1062, 0
      %v1117 = vsel %vm1079, %v1063, 0
      %v1120 = vsel %vm1079, %v1064, 0
      %v1123 = vsel %vm1079, %v1065, 0
      %v1126 = vsel %vm1079, %v1066, 0
      %1128 = vmatpush.msra.mxu0 0.0
      %1129 = vmatpush.msra.mxu0 0.0
      %1130 = vmatpush.msra.mxu0 0.0
      %1131 = vmatpush.msra.mxu0 0.0
      %1132 = vmatpush.msra.mxu0 0.0
      %1133 = vmatpush.msra.mxu0 0.0
      %1134 = vmatpush.msra.mxu0 0.0
      %1135 = vmatpush.msra.mxu0 0.0
      %v1136 = vand.u32 %v1074, 4294901760
      %1137 = vmatpush.msra.mxu0 %v1136
      %v1138 = vand.u32 %v1073, 4294901760
      %1139 = vmatpush.msra.mxu0 %v1138
      %v1140 = vand.u32 %v1072, 4294901760
      %1141 = vmatpush.msra.mxu0 %v1140
      %v1142 = vand.u32 %v1071, 4294901760
      %1143 = vmatpush.msra.mxu0 %v1142
      %v1144 = vand.u32 %v1070, 4294901760
      %1145 = vmatpush.msra.mxu0 %v1144
      %v1146 = vand.u32 %v1069, 4294901760
      %1147 = vmatpush.msra.mxu0 %v1146
      %v1148 = vand.u32 %v1068, 4294901760
      %1149 = vmatpush.msra.mxu0 %v1148
      %v1150 = vand.u32 %v1067, 4294901760
      %1151 = vmatpush.msra.mxu0 %v1150
      %v1152 = vand.u32 %v1081, 4294901760
      %v1153 = vsub.f32 %v1081, %v1152
      %v1154 = vand.u32 %v1153, 4294901760
      %v1155 = vsub.f32 %v1153, %v1154
      %v1156 = vand.u32 %v1155, 4294901760
      %1157 = vmatmul.f32.gmra.mxu0 %v1156
      %v1158 = vpop.f32.mrf.mxu0
      %v1159 = vadd.f32 %v1077, %v1158
      %v1160 = vand.u32 %v1084, 4294901760
      %v1161 = vsub.f32 %v1084, %v1160
      %v1162 = vand.u32 %v1161, 4294901760
      %v1163 = vsub.f32 %v1161, %v1162
      %v1164 = vand.u32 %v1163, 4294901760
      %1165 = vmatmul.f32.gmra.mxu0 %v1164
      %v1166 = vpop.f32.mrf.mxu0
      %v1167 = vadd.f32 %v1077, %v1166
      %v1168 = vand.u32 %v1087, 4294901760
      %v1169 = vsub.f32 %v1087, %v1168
      %v1170 = vand.u32 %v1169, 4294901760
      %v1171 = vsub.f32 %v1169, %v1170
      %v1172 = vand.u32 %v1171, 4294901760
      %1173 = vmatmul.f32.gmra.mxu0 %v1172
      %v1174 = vpop.f32.mrf.mxu0
      %v1175 = vadd.f32 %v1077, %v1174
      %v1176 = vand.u32 %v1090, 4294901760
      %v1177 = vsub.f32 %v1090, %v1176
      %v1178 = vand.u32 %v1177, 4294901760
      %v1179 = vsub.f32 %v1177, %v1178
      %v1180 = vand.u32 %v1179, 4294901760
      %1181 = vmatmul.f32.gmra.mxu0 %v1180
      %v1182 = vpop.f32.mrf.mxu0
      %v1183 = vadd.f32 %v1077, %v1182
      %v1184 = vand.u32 %v1093, 4294901760
      %v1185 = vsub.f32 %v1093, %v1184
      %v1186 = vand.u32 %v1185, 4294901760
      %v1187 = vsub.f32 %v1185, %v1186
      %v1188 = vand.u32 %v1187, 4294901760
      %1189 = vmatmul.f32.gmra.mxu0 %v1188
      %v1190 = vpop.f32.mrf.mxu0
      %v1191 = vadd.f32 %v1077, %v1190
      %v1192 = vand.u32 %v1096, 4294901760
      %v1193 = vsub.f32 %v1096, %v1192
      %v1194 = vand.u32 %v1193, 4294901760
      %v1195 = vsub.f32 %v1193, %v1194
      %v1196 = vand.u32 %v1195, 4294901760
      %1197 = vmatmul.f32.gmra.mxu0 %v1196
      %v1198 = vpop.f32.mrf.mxu0
      %v1199 = vadd.f32 %v1077, %v1198
      %v1200 = vand.u32 %v1099, 4294901760
      %v1201 = vsub.f32 %v1099, %v1200
      %v1202 = vand.u32 %v1201, 4294901760
      %v1203 = vsub.f32 %v1201, %v1202
      %v1204 = vand.u32 %v1203, 4294901760
      %1205 = vmatmul.f32.gmra.mxu0 %v1204
      %v1206 = vpop.f32.mrf.mxu0
      %v1207 = vadd.f32 %v1077, %v1206
      %v1208 = vand.u32 %v1102, 4294901760
      %v1209 = vsub.f32 %v1102, %v1208
      %v1210 = vand.u32 %v1209, 4294901760
      %v1211 = vsub.f32 %v1209, %v1210
      %v1212 = vand.u32 %v1211, 4294901760
      %1213 = vmatmul.f32.gmra.mxu0 %v1212
      %v1214 = vpop.f32.mrf.mxu0
      %v1215 = vadd.f32 %v1077, %v1214
      %v1216 = vand.u32 %v1105, 4294901760
      %v1217 = vsub.f32 %v1105, %v1216
      %v1218 = vand.u32 %v1217, 4294901760
      %v1219 = vsub.f32 %v1217, %v1218
      %v1220 = vand.u32 %v1219, 4294901760
      %1221 = vmatmul.f32.gmra.mxu0 %v1220
      %v1222 = vpop.f32.mrf.mxu0
      %v1223 = vadd.f32 %v1077, %v1222
      %v1224 = vand.u32 %v1108, 4294901760
      %v1225 = vsub.f32 %v1108, %v1224
      %v1226 = vand.u32 %v1225, 4294901760
      %v1227 = vsub.f32 %v1225, %v1226
      %v1228 = vand.u32 %v1227, 4294901760
      %1229 = vmatmul.f32.gmra.mxu0 %v1228
      %v1230 = vpop.f32.mrf.mxu0
      %v1231 = vadd.f32 %v1077, %v1230
      %v1232 = vand.u32 %v1111, 4294901760
      %v1233 = vsub.f32 %v1111, %v1232
      %v1234 = vand.u32 %v1233, 4294901760
      %v1235 = vsub.f32 %v1233, %v1234
      %v1236 = vand.u32 %v1235, 4294901760
      %1237 = vmatmul.f32.gmra.mxu0 %v1236
      %v1238 = vpop.f32.mrf.mxu0
      %v1239 = vadd.f32 %v1077, %v1238
      %v1240 = vand.u32 %v1114, 4294901760
      %v1241 = vsub.f32 %v1114, %v1240
      %v1242 = vand.u32 %v1241, 4294901760
      %v1243 = vsub.f32 %v1241, %v1242
      %v1244 = vand.u32 %v1243, 4294901760
      %1245 = vmatmul.f32.gmra.mxu0 %v1244
      %v1246 = vpop.f32.mrf.mxu0
      %v1247 = vadd.f32 %v1077, %v1246
      %v1248 = vand.u32 %v1117, 4294901760
      %v1249 = vsub.f32 %v1117, %v1248
      %v1250 = vand.u32 %v1249, 4294901760
      %v1251 = vsub.f32 %v1249, %v1250
      %v1252 = vand.u32 %v1251, 4294901760
      %1253 = vmatmul.f32.gmra.mxu0 %v1252
      %v1254 = vpop.f32.mrf.mxu0
      %v1255 = vadd.f32 %v1077, %v1254
      %v1256 = vand.u32 %v1120, 4294901760
      %v1257 = vsub.f32 %v1120, %v1256
      %v1258 = vand.u32 %v1257, 4294901760
      %v1259 = vsub.f32 %v1257, %v1258
      %v1260 = vand.u32 %v1259, 4294901760
      %1261 = vmatmul.f32.gmra.mxu0 %v1260
      %v1262 = vpop.f32.mrf.mxu0
      %v1263 = vadd.f32 %v1077, %v1262
      %v1264 = vand.u32 %v1123, 4294901760
      %v1265 = vsub.f32 %v1123, %v1264
      %v1266 = vand.u32 %v1265, 4294901760
      %v1267 = vsub.f32 %v1265, %v1266
      %v1268 = vand.u32 %v1267, 4294901760
      %1269 = vmatmul.f32.gmra.mxu0 %v1268
      %v1270 = vpop.f32.mrf.mxu0
      %v1271 = vadd.f32 %v1077, %v1270
      %v1272 = vand.u32 %v1126, 4294901760
      %v1273 = vsub.f32 %v1126, %v1272
      %v1274 = vand.u32 %v1273, 4294901760
      %v1275 = vsub.f32 %v1273, %v1274
      %v1276 = vand.u32 %v1275, 4294901760
      %1277 = vmatmul.f32.gmra.mxu0 %v1276
      %v1278 = vpop.f32.mrf.mxu0
      %v1279 = vadd.f32 %v1077, %v1278
      %1280 = vdwg.mxu0
      %1281 = vmatpush.msra.mxu0 0.0
      %1282 = vmatpush.msra.mxu0 0.0
      %1283 = vmatpush.msra.mxu0 0.0
      %1284 = vmatpush.msra.mxu0 0.0
      %1285 = vmatpush.msra.mxu0 0.0
      %1286 = vmatpush.msra.mxu0 0.0
      %1287 = vmatpush.msra.mxu0 0.0
      %1288 = vmatpush.msra.mxu0 0.0
      %v1289 = vand.u32 %v1074, 4294901760
      %v1290 = vsub.f32 %v1074, %v1289
      %v1291 = vand.u32 %v1290, 4294901760
      %v1292 = vsub.f32 %v1290, %v1291
      %v1293 = vand.u32 %v1292, 4294901760
      %1294 = vmatpush.msra.mxu0 %v1293
      %v1295 = vand.u32 %v1073, 4294901760
      %v1296 = vsub.f32 %v1073, %v1295
      %v1297 = vand.u32 %v1296, 4294901760
      %v1298 = vsub.f32 %v1296, %v1297
      %v1299 = vand.u32 %v1298, 4294901760
      %1300 = vmatpush.msra.mxu0 %v1299
      %v1301 = vand.u32 %v1072, 4294901760
      %v1302 = vsub.f32 %v1072, %v1301
      %v1303 = vand.u32 %v1302, 4294901760
      %v1304 = vsub.f32 %v1302, %v1303
      %v1305 = vand.u32 %v1304, 4294901760
      %1306 = vmatpush.msra.mxu0 %v1305
      %v1307 = vand.u32 %v1071, 4294901760
      %v1308 = vsub.f32 %v1071, %v1307
      %v1309 = vand.u32 %v1308, 4294901760
      %v1310 = vsub.f32 %v1308, %v1309
      %v1311 = vand.u32 %v1310, 4294901760
      %1312 = vmatpush.msra.mxu0 %v1311
      %v1313 = vand.u32 %v1070, 4294901760
      %v1314 = vsub.f32 %v1070, %v1313
      %v1315 = vand.u32 %v1314, 4294901760
      %v1316 = vsub.f32 %v1314, %v1315
      %v1317 = vand.u32 %v1316, 4294901760
      %1318 = vmatpush.msra.mxu0 %v1317
      %v1319 = vand.u32 %v1069, 4294901760
      %v1320 = vsub.f32 %v1069, %v1319
      %v1321 = vand.u32 %v1320, 4294901760
      %v1322 = vsub.f32 %v1320, %v1321
      %v1323 = vand.u32 %v1322, 4294901760
      %1324 = vmatpush.msra.mxu0 %v1323
      %v1325 = vand.u32 %v1068, 4294901760
      %v1326 = vsub.f32 %v1068, %v1325
      %v1327 = vand.u32 %v1326, 4294901760
      %v1328 = vsub.f32 %v1326, %v1327
      %v1329 = vand.u32 %v1328, 4294901760
      %1330 = vmatpush.msra.mxu0 %v1329
      %v1331 = vand.u32 %v1067, 4294901760
      %v1332 = vsub.f32 %v1067, %v1331
      %v1333 = vand.u32 %v1332, 4294901760
      %v1334 = vsub.f32 %v1332, %v1333
      %v1335 = vand.u32 %v1334, 4294901760
      %1336 = vmatpush.msra.mxu0 %v1335
      %v1337 = vand.u32 %v1081, 4294901760
      %1338 = vmatmul.f32.gmra.mxu0 %v1337
      %v1339 = vpop.f32.mrf.mxu0
      %v1340 = vadd.f32 %v1159, %v1339
      %v1341 = vand.u32 %v1084, 4294901760
      %1342 = vmatmul.f32.gmra.mxu0 %v1341
      %v1343 = vpop.f32.mrf.mxu0
      %v1344 = vadd.f32 %v1167, %v1343
      %v1345 = vand.u32 %v1087, 4294901760
      %1346 = vmatmul.f32.gmra.mxu0 %v1345
      %v1347 = vpop.f32.mrf.mxu0
      %v1348 = vadd.f32 %v1175, %v1347
      %v1349 = vand.u32 %v1090, 4294901760
      %1350 = vmatmul.f32.gmra.mxu0 %v1349
      %v1351 = vpop.f32.mrf.mxu0
      %v1352 = vadd.f32 %v1183, %v1351
      %v1353 = vand.u32 %v1093, 4294901760
      %1354 = vmatmul.f32.gmra.mxu0 %v1353
      %v1355 = vpop.f32.mrf.mxu0
      %v1356 = vadd.f32 %v1191, %v1355
      %v1357 = vand.u32 %v1096, 4294901760
      %1358 = vmatmul.f32.gmra.mxu0 %v1357
      %v1359 = vpop.f32.mrf.mxu0
      %v1360 = vadd.f32 %v1199, %v1359
      %v1361 = vand.u32 %v1099, 4294901760
      %1362 = vmatmul.f32.gmra.mxu0 %v1361
      %v1363 = vpop.f32.mrf.mxu0
      %v1364 = vadd.f32 %v1207, %v1363
      %v1365 = vand.u32 %v1102, 4294901760
      %1366 = vmatmul.f32.gmra.mxu0 %v1365
      %v1367 = vpop.f32.mrf.mxu0
      %v1368 = vadd.f32 %v1215, %v1367
      %v1369 = vand.u32 %v1105, 4294901760
      %1370 = vmatmul.f32.gmra.mxu0 %v1369
      %v1371 = vpop.f32.mrf.mxu0
      %v1372 = vadd.f32 %v1223, %v1371
      %v1373 = vand.u32 %v1108, 4294901760
      %1374 = vmatmul.f32.gmra.mxu0 %v1373
      %v1375 = vpop.f32.mrf.mxu0
      %v1376 = vadd.f32 %v1231, %v1375
      %v1377 = vand.u32 %v1111, 4294901760
      %1378 = vmatmul.f32.gmra.mxu0 %v1377
      %v1379 = vpop.f32.mrf.mxu0
      %v1380 = vadd.f32 %v1239, %v1379
      %v1381 = vand.u32 %v1114, 4294901760
      %1382 = vmatmul.f32.gmra.mxu0 %v1381
      %v1383 = vpop.f32.mrf.mxu0
      %v1384 = vadd.f32 %v1247, %v1383
      %v1385 = vand.u32 %v1117, 4294901760
      %1386 = vmatmul.f32.gmra.mxu0 %v1385
      %v1387 = vpop.f32.mrf.mxu0
      %v1388 = vadd.f32 %v1255, %v1387
      %v1389 = vand.u32 %v1120, 4294901760
      %1390 = vmatmul.f32.gmra.mxu0 %v1389
      %v1391 = vpop.f32.mrf.mxu0
      %v1392 = vadd.f32 %v1263, %v1391
      %v1393 = vand.u32 %v1123, 4294901760
      %1394 = vmatmul.f32.gmra.mxu0 %v1393
      %v1395 = vpop.f32.mrf.mxu0
      %v1396 = vadd.f32 %v1271, %v1395
      %v1397 = vand.u32 %v1126, 4294901760
      %1398 = vmatmul.f32.gmra.mxu0 %v1397
      %v1399 = vpop.f32.mrf.mxu0
      %v1400 = vadd.f32 %v1279, %v1399
      %1401 = vdwg.mxu0
      %1402 = vmatpush.msra.mxu0 0.0
      %1403 = vmatpush.msra.mxu0 0.0
      %1404 = vmatpush.msra.mxu0 0.0
      %1405 = vmatpush.msra.mxu0 0.0
      %1406 = vmatpush.msra.mxu0 0.0
      %1407 = vmatpush.msra.mxu0 0.0
      %1408 = vmatpush.msra.mxu0 0.0
      %1409 = vmatpush.msra.mxu0 0.0
      %v1410 = vand.u32 %v1074, 4294901760
      %v1411 = vsub.f32 %v1074, %v1410
      %1412 = vmatpush.msra.mxu0 %v1411
      %v1413 = vand.u32 %v1073, 4294901760
      %v1414 = vsub.f32 %v1073, %v1413
      %1415 = vmatpush.msra.mxu0 %v1414
      %v1416 = vand.u32 %v1072, 4294901760
      %v1417 = vsub.f32 %v1072, %v1416
      %1418 = vmatpush.msra.mxu0 %v1417
      %v1419 = vand.u32 %v1071, 4294901760
      %v1420 = vsub.f32 %v1071, %v1419
      %1421 = vmatpush.msra.mxu0 %v1420
      %v1422 = vand.u32 %v1070, 4294901760
      %v1423 = vsub.f32 %v1070, %v1422
      %1424 = vmatpush.msra.mxu0 %v1423
      %v1425 = vand.u32 %v1069, 4294901760
      %v1426 = vsub.f32 %v1069, %v1425
      %1427 = vmatpush.msra.mxu0 %v1426
      %v1428 = vand.u32 %v1068, 4294901760
      %v1429 = vsub.f32 %v1068, %v1428
      %1430 = vmatpush.msra.mxu0 %v1429
      %v1431 = vand.u32 %v1067, 4294901760
      %v1432 = vsub.f32 %v1067, %v1431
      %1433 = vmatpush.msra.mxu0 %v1432
      %v1434 = vand.u32 %v1081, 4294901760
      %v1435 = vsub.f32 %v1081, %v1434
      %1436 = vmatmul.f32.gmra.mxu0 %v1435
      %v1437 = vpop.f32.mrf.mxu0
      %v1438 = vadd.f32 %v1340, %v1437
      %v1439 = vand.u32 %v1084, 4294901760
      %v1440 = vsub.f32 %v1084, %v1439
      %1441 = vmatmul.f32.gmra.mxu0 %v1440
      %v1442 = vpop.f32.mrf.mxu0
      %v1443 = vadd.f32 %v1344, %v1442
      %v1444 = vand.u32 %v1087, 4294901760
      %v1445 = vsub.f32 %v1087, %v1444
      %1446 = vmatmul.f32.gmra.mxu0 %v1445
      %v1447 = vpop.f32.mrf.mxu0
      %v1448 = vadd.f32 %v1348, %v1447
      %v1449 = vand.u32 %v1090, 4294901760
      %v1450 = vsub.f32 %v1090, %v1449
      %1451 = vmatmul.f32.gmra.mxu0 %v1450
      %v1452 = vpop.f32.mrf.mxu0
      %v1453 = vadd.f32 %v1352, %v1452
      %v1454 = vand.u32 %v1093, 4294901760
      %v1455 = vsub.f32 %v1093, %v1454
      %1456 = vmatmul.f32.gmra.mxu0 %v1455
      %v1457 = vpop.f32.mrf.mxu0
      %v1458 = vadd.f32 %v1356, %v1457
      %v1459 = vand.u32 %v1096, 4294901760
      %v1460 = vsub.f32 %v1096, %v1459
      %1461 = vmatmul.f32.gmra.mxu0 %v1460
      %v1462 = vpop.f32.mrf.mxu0
      %v1463 = vadd.f32 %v1360, %v1462
      %v1464 = vand.u32 %v1099, 4294901760
      %v1465 = vsub.f32 %v1099, %v1464
      %1466 = vmatmul.f32.gmra.mxu0 %v1465
      %v1467 = vpop.f32.mrf.mxu0
      %v1468 = vadd.f32 %v1364, %v1467
      %v1469 = vand.u32 %v1102, 4294901760
      %v1470 = vsub.f32 %v1102, %v1469
      %1471 = vmatmul.f32.gmra.mxu0 %v1470
      %v1472 = vpop.f32.mrf.mxu0
      %v1473 = vadd.f32 %v1368, %v1472
      %v1474 = vand.u32 %v1105, 4294901760
      %v1475 = vsub.f32 %v1105, %v1474
      %1476 = vmatmul.f32.gmra.mxu0 %v1475
      %v1477 = vpop.f32.mrf.mxu0
      %v1478 = vadd.f32 %v1372, %v1477
      %v1479 = vand.u32 %v1108, 4294901760
      %v1480 = vsub.f32 %v1108, %v1479
      %1481 = vmatmul.f32.gmra.mxu0 %v1480
      %v1482 = vpop.f32.mrf.mxu0
      %v1483 = vadd.f32 %v1376, %v1482
      %v1484 = vand.u32 %v1111, 4294901760
      %v1485 = vsub.f32 %v1111, %v1484
      %1486 = vmatmul.f32.gmra.mxu0 %v1485
      %v1487 = vpop.f32.mrf.mxu0
      %v1488 = vadd.f32 %v1380, %v1487
      %v1489 = vand.u32 %v1114, 4294901760
      %v1490 = vsub.f32 %v1114, %v1489
      %1491 = vmatmul.f32.gmra.mxu0 %v1490
      %v1492 = vpop.f32.mrf.mxu0
      %v1493 = vadd.f32 %v1384, %v1492
      %v1494 = vand.u32 %v1117, 4294901760
      %v1495 = vsub.f32 %v1117, %v1494
      %1496 = vmatmul.f32.gmra.mxu0 %v1495
      %v1497 = vpop.f32.mrf.mxu0
      %v1498 = vadd.f32 %v1388, %v1497
      %v1499 = vand.u32 %v1120, 4294901760
      %v1500 = vsub.f32 %v1120, %v1499
      %1501 = vmatmul.f32.gmra.mxu0 %v1500
      %v1502 = vpop.f32.mrf.mxu0
      %v1503 = vadd.f32 %v1392, %v1502
      %v1504 = vand.u32 %v1123, 4294901760
      %v1505 = vsub.f32 %v1123, %v1504
      %1506 = vmatmul.f32.gmra.mxu0 %v1505
      %v1507 = vpop.f32.mrf.mxu0
      %v1508 = vadd.f32 %v1396, %v1507
      %v1509 = vand.u32 %v1126, 4294901760
      %v1510 = vsub.f32 %v1126, %v1509
      %1511 = vmatmul.f32.gmra.mxu0 %v1510
      %v1512 = vpop.f32.mrf.mxu0
      %v1513 = vadd.f32 %v1400, %v1512
      %1514 = vdwg.mxu0
      %1515 = vmatpush.msra.mxu0 0.0
      %1516 = vmatpush.msra.mxu0 0.0
      %1517 = vmatpush.msra.mxu0 0.0
      %1518 = vmatpush.msra.mxu0 0.0
      %1519 = vmatpush.msra.mxu0 0.0
      %1520 = vmatpush.msra.mxu0 0.0
      %1521 = vmatpush.msra.mxu0 0.0
      %1522 = vmatpush.msra.mxu0 0.0
      %v1523 = vand.u32 %v1074, 4294901760
      %1524 = vmatpush.msra.mxu0 %v1523
      %v1525 = vand.u32 %v1073, 4294901760
      %1526 = vmatpush.msra.mxu0 %v1525
      %v1527 = vand.u32 %v1072, 4294901760
      %1528 = vmatpush.msra.mxu0 %v1527
      %v1529 = vand.u32 %v1071, 4294901760
      %1530 = vmatpush.msra.mxu0 %v1529
      %v1531 = vand.u32 %v1070, 4294901760
      %1532 = vmatpush.msra.mxu0 %v1531
      %v1533 = vand.u32 %v1069, 4294901760
      %1534 = vmatpush.msra.mxu0 %v1533
      %v1535 = vand.u32 %v1068, 4294901760
      %1536 = vmatpush.msra.mxu0 %v1535
      %v1537 = vand.u32 %v1067, 4294901760
      %1538 = vmatpush.msra.mxu0 %v1537
      %v1539 = vand.u32 %v1081, 4294901760
      %v1540 = vsub.f32 %v1081, %v1539
      %v1541 = vand.u32 %v1540, 4294901760
      %1542 = vmatmul.f32.gmra.mxu0 %v1541
      %v1543 = vpop.f32.mrf.mxu0
      %v1544 = vadd.f32 %v1438, %v1543
      %v1545 = vand.u32 %v1084, 4294901760
      %v1546 = vsub.f32 %v1084, %v1545
      %v1547 = vand.u32 %v1546, 4294901760
      %1548 = vmatmul.f32.gmra.mxu0 %v1547
      %v1549 = vpop.f32.mrf.mxu0
      %v1550 = vadd.f32 %v1443, %v1549
      %v1551 = vand.u32 %v1087, 4294901760
      %v1552 = vsub.f32 %v1087, %v1551
      %v1553 = vand.u32 %v1552, 4294901760
      %1554 = vmatmul.f32.gmra.mxu0 %v1553
      %v1555 = vpop.f32.mrf.mxu0
      %v1556 = vadd.f32 %v1448, %v1555
      %v1557 = vand.u32 %v1090, 4294901760
      %v1558 = vsub.f32 %v1090, %v1557
      %v1559 = vand.u32 %v1558, 4294901760
      %1560 = vmatmul.f32.gmra.mxu0 %v1559
      %v1561 = vpop.f32.mrf.mxu0
      %v1562 = vadd.f32 %v1453, %v1561
      %v1563 = vand.u32 %v1093, 4294901760
      %v1564 = vsub.f32 %v1093, %v1563
      %v1565 = vand.u32 %v1564, 4294901760
      %1566 = vmatmul.f32.gmra.mxu0 %v1565
      %v1567 = vpop.f32.mrf.mxu0
      %v1568 = vadd.f32 %v1458, %v1567
      %v1569 = vand.u32 %v1096, 4294901760
      %v1570 = vsub.f32 %v1096, %v1569
      %v1571 = vand.u32 %v1570, 4294901760
      %1572 = vmatmul.f32.gmra.mxu0 %v1571
      %v1573 = vpop.f32.mrf.mxu0
      %v1574 = vadd.f32 %v1463, %v1573
      %v1575 = vand.u32 %v1099, 4294901760
      %v1576 = vsub.f32 %v1099, %v1575
      %v1577 = vand.u32 %v1576, 4294901760
      %1578 = vmatmul.f32.gmra.mxu0 %v1577
      %v1579 = vpop.f32.mrf.mxu0
      %v1580 = vadd.f32 %v1468, %v1579
      %v1581 = vand.u32 %v1102, 4294901760
      %v1582 = vsub.f32 %v1102, %v1581
      %v1583 = vand.u32 %v1582, 4294901760
      %1584 = vmatmul.f32.gmra.mxu0 %v1583
      %v1585 = vpop.f32.mrf.mxu0
      %v1586 = vadd.f32 %v1473, %v1585
      %v1587 = vand.u32 %v1105, 4294901760
      %v1588 = vsub.f32 %v1105, %v1587
      %v1589 = vand.u32 %v1588, 4294901760
      %1590 = vmatmul.f32.gmra.mxu0 %v1589
      %v1591 = vpop.f32.mrf.mxu0
      %v1592 = vadd.f32 %v1478, %v1591
      %v1593 = vand.u32 %v1108, 4294901760
      %v1594 = vsub.f32 %v1108, %v1593
      %v1595 = vand.u32 %v1594, 4294901760
      %1596 = vmatmul.f32.gmra.mxu0 %v1595
      %v1597 = vpop.f32.mrf.mxu0
      %v1598 = vadd.f32 %v1483, %v1597
      %v1599 = vand.u32 %v1111, 4294901760
      %v1600 = vsub.f32 %v1111, %v1599
      %v1601 = vand.u32 %v1600, 4294901760
      %1602 = vmatmul.f32.gmra.mxu0 %v1601
      %v1603 = vpop.f32.mrf.mxu0
      %v1604 = vadd.f32 %v1488, %v1603
      %v1605 = vand.u32 %v1114, 4294901760
      %v1606 = vsub.f32 %v1114, %v1605
      %v1607 = vand.u32 %v1606, 4294901760
      %1608 = vmatmul.f32.gmra.mxu0 %v1607
      %v1609 = vpop.f32.mrf.mxu0
      %v1610 = vadd.f32 %v1493, %v1609
      %v1611 = vand.u32 %v1117, 4294901760
      %v1612 = vsub.f32 %v1117, %v1611
      %v1613 = vand.u32 %v1612, 4294901760
      %1614 = vmatmul.f32.gmra.mxu0 %v1613
      %v1615 = vpop.f32.mrf.mxu0
      %v1616 = vadd.f32 %v1498, %v1615
      %v1617 = vand.u32 %v1120, 4294901760
      %v1618 = vsub.f32 %v1120, %v1617
      %v1619 = vand.u32 %v1618, 4294901760
      %1620 = vmatmul.f32.gmra.mxu0 %v1619
      %v1621 = vpop.f32.mrf.mxu0
      %v1622 = vadd.f32 %v1503, %v1621
      %v1623 = vand.u32 %v1123, 4294901760
      %v1624 = vsub.f32 %v1123, %v1623
      %v1625 = vand.u32 %v1624, 4294901760
      %1626 = vmatmul.f32.gmra.mxu0 %v1625
      %v1627 = vpop.f32.mrf.mxu0
      %v1628 = vadd.f32 %v1508, %v1627
      %v1629 = vand.u32 %v1126, 4294901760
      %v1630 = vsub.f32 %v1126, %v1629
      %v1631 = vand.u32 %v1630, 4294901760
      %1632 = vmatmul.f32.gmra.mxu0 %v1631
      %v1633 = vpop.f32.mrf.mxu0
      %v1634 = vadd.f32 %v1513, %v1633
      %1635 = vdwg.mxu0
      %1636 = vmatpush.msra.mxu0 0.0
      %1637 = vmatpush.msra.mxu0 0.0
      %1638 = vmatpush.msra.mxu0 0.0
      %1639 = vmatpush.msra.mxu0 0.0
      %1640 = vmatpush.msra.mxu0 0.0
      %1641 = vmatpush.msra.mxu0 0.0
      %1642 = vmatpush.msra.mxu0 0.0
      %1643 = vmatpush.msra.mxu0 0.0
      %v1644 = vand.u32 %v1074, 4294901760
      %v1645 = vsub.f32 %v1074, %v1644
      %v1646 = vand.u32 %v1645, 4294901760
      %1647 = vmatpush.msra.mxu0 %v1646
      %v1648 = vand.u32 %v1073, 4294901760
      %v1649 = vsub.f32 %v1073, %v1648
      %v1650 = vand.u32 %v1649, 4294901760
      %1651 = vmatpush.msra.mxu0 %v1650
      %v1652 = vand.u32 %v1072, 4294901760
      %v1653 = vsub.f32 %v1072, %v1652
      %v1654 = vand.u32 %v1653, 4294901760
      %1655 = vmatpush.msra.mxu0 %v1654
      %v1656 = vand.u32 %v1071, 4294901760
      %v1657 = vsub.f32 %v1071, %v1656
      %v1658 = vand.u32 %v1657, 4294901760
      %1659 = vmatpush.msra.mxu0 %v1658
      %v1660 = vand.u32 %v1070, 4294901760
      %v1661 = vsub.f32 %v1070, %v1660
      %v1662 = vand.u32 %v1661, 4294901760
      %1663 = vmatpush.msra.mxu0 %v1662
      %v1664 = vand.u32 %v1069, 4294901760
      %v1665 = vsub.f32 %v1069, %v1664
      %v1666 = vand.u32 %v1665, 4294901760
      %1667 = vmatpush.msra.mxu0 %v1666
      %v1668 = vand.u32 %v1068, 4294901760
      %v1669 = vsub.f32 %v1068, %v1668
      %v1670 = vand.u32 %v1669, 4294901760
      %1671 = vmatpush.msra.mxu0 %v1670
      %v1672 = vand.u32 %v1067, 4294901760
      %v1673 = vsub.f32 %v1067, %v1672
      %v1674 = vand.u32 %v1673, 4294901760
      %1675 = vmatpush.msra.mxu0 %v1674
      %v1676 = vand.u32 %v1081, 4294901760
      %1677 = vmatmul.f32.gmra.mxu0 %v1676
      %v1678 = vpop.f32.mrf.mxu0
      %v1679 = vadd.f32 %v1544, %v1678
      %v1680 = vand.u32 %v1084, 4294901760
      %1681 = vmatmul.f32.gmra.mxu0 %v1680
      %v1682 = vpop.f32.mrf.mxu0
      %v1683 = vadd.f32 %v1550, %v1682
      %v1684 = vand.u32 %v1087, 4294901760
      %1685 = vmatmul.f32.gmra.mxu0 %v1684
      %v1686 = vpop.f32.mrf.mxu0
      %v1687 = vadd.f32 %v1556, %v1686
      %v1688 = vand.u32 %v1090, 4294901760
      %1689 = vmatmul.f32.gmra.mxu0 %v1688
      %v1690 = vpop.f32.mrf.mxu0
      %v1691 = vadd.f32 %v1562, %v1690
      %v1692 = vand.u32 %v1093, 4294901760
      %1693 = vmatmul.f32.gmra.mxu0 %v1692
      %v1694 = vpop.f32.mrf.mxu0
      %v1695 = vadd.f32 %v1568, %v1694
      %v1696 = vand.u32 %v1096, 4294901760
      %1697 = vmatmul.f32.gmra.mxu0 %v1696
      %v1698 = vpop.f32.mrf.mxu0
      %v1699 = vadd.f32 %v1574, %v1698
      %v1700 = vand.u32 %v1099, 4294901760
      %1701 = vmatmul.f32.gmra.mxu0 %v1700
      %v1702 = vpop.f32.mrf.mxu0
      %v1703 = vadd.f32 %v1580, %v1702
      %v1704 = vand.u32 %v1102, 4294901760
      %1705 = vmatmul.f32.gmra.mxu0 %v1704
      %v1706 = vpop.f32.mrf.mxu0
      %v1707 = vadd.f32 %v1586, %v1706
      %v1708 = vand.u32 %v1105, 4294901760
      %1709 = vmatmul.f32.gmra.mxu0 %v1708
      %v1710 = vpop.f32.mrf.mxu0
      %v1711 = vadd.f32 %v1592, %v1710
      %v1712 = vand.u32 %v1108, 4294901760
      %1713 = vmatmul.f32.gmra.mxu0 %v1712
      %v1714 = vpop.f32.mrf.mxu0
      %v1715 = vadd.f32 %v1598, %v1714
      %v1716 = vand.u32 %v1111, 4294901760
      %1717 = vmatmul.f32.gmra.mxu0 %v1716
      %v1718 = vpop.f32.mrf.mxu0
      %v1719 = vadd.f32 %v1604, %v1718
      %v1720 = vand.u32 %v1114, 4294901760
      %1721 = vmatmul.f32.gmra.mxu0 %v1720
      %v1722 = vpop.f32.mrf.mxu0
      %v1723 = vadd.f32 %v1610, %v1722
      %v1724 = vand.u32 %v1117, 4294901760
      %1725 = vmatmul.f32.gmra.mxu0 %v1724
      %v1726 = vpop.f32.mrf.mxu0
      %v1727 = vadd.f32 %v1616, %v1726
      %v1728 = vand.u32 %v1120, 4294901760
      %1729 = vmatmul.f32.gmra.mxu0 %v1728
      %v1730 = vpop.f32.mrf.mxu0
      %v1731 = vadd.f32 %v1622, %v1730
      %v1732 = vand.u32 %v1123, 4294901760
      %1733 = vmatmul.f32.gmra.mxu0 %v1732
      %v1734 = vpop.f32.mrf.mxu0
      %v1735 = vadd.f32 %v1628, %v1734
      %v1736 = vand.u32 %v1126, 4294901760
      %1737 = vmatmul.f32.gmra.mxu0 %v1736
      %v1738 = vpop.f32.mrf.mxu0
      %v1739 = vadd.f32 %v1634, %v1738
      %1740 = vdwg.mxu0
      %1741 = vmatpush.msra.mxu0 0.0
      %1742 = vmatpush.msra.mxu0 0.0
      %1743 = vmatpush.msra.mxu0 0.0
      %1744 = vmatpush.msra.mxu0 0.0
      %1745 = vmatpush.msra.mxu0 0.0
      %1746 = vmatpush.msra.mxu0 0.0
      %1747 = vmatpush.msra.mxu0 0.0
      %1748 = vmatpush.msra.mxu0 0.0
      %v1749 = vand.u32 %v1074, 4294901760
      %1750 = vmatpush.msra.mxu0 %v1749
      %v1751 = vand.u32 %v1073, 4294901760
      %1752 = vmatpush.msra.mxu0 %v1751
      %v1753 = vand.u32 %v1072, 4294901760
      %1754 = vmatpush.msra.mxu0 %v1753
      %v1755 = vand.u32 %v1071, 4294901760
      %1756 = vmatpush.msra.mxu0 %v1755
      %v1757 = vand.u32 %v1070, 4294901760
      %1758 = vmatpush.msra.mxu0 %v1757
      %v1759 = vand.u32 %v1069, 4294901760
      %1760 = vmatpush.msra.mxu0 %v1759
      %v1761 = vand.u32 %v1068, 4294901760
      %1762 = vmatpush.msra.mxu0 %v1761
      %v1763 = vand.u32 %v1067, 4294901760
      %1764 = vmatpush.msra.mxu0 %v1763
      %v1765 = vand.u32 %v1081, 4294901760
      %1766 = vmatmul.f32.gmra.mxu0 %v1765
      %v1767 = vpop.f32.mrf.mxu0
      %v1768 = vadd.f32 %v1679, %v1767
      %v1769 = vand.u32 %v1084, 4294901760
      %1770 = vmatmul.f32.gmra.mxu0 %v1769
      %v1771 = vpop.f32.mrf.mxu0
      %v1772 = vadd.f32 %v1683, %v1771
      %v1773 = vand.u32 %v1087, 4294901760
      %1774 = vmatmul.f32.gmra.mxu0 %v1773
      %v1775 = vpop.f32.mrf.mxu0
      %v1776 = vadd.f32 %v1687, %v1775
      %v1777 = vand.u32 %v1090, 4294901760
      %1778 = vmatmul.f32.gmra.mxu0 %v1777
      %v1779 = vpop.f32.mrf.mxu0
      %v1780 = vadd.f32 %v1691, %v1779
      %v1781 = vand.u32 %v1093, 4294901760
      %1782 = vmatmul.f32.gmra.mxu0 %v1781
      %v1783 = vpop.f32.mrf.mxu0
      %v1784 = vadd.f32 %v1695, %v1783
      %v1785 = vand.u32 %v1096, 4294901760
      %1786 = vmatmul.f32.gmra.mxu0 %v1785
      %v1787 = vpop.f32.mrf.mxu0
      %v1788 = vadd.f32 %v1699, %v1787
      %v1789 = vand.u32 %v1099, 4294901760
      %1790 = vmatmul.f32.gmra.mxu0 %v1789
      %v1791 = vpop.f32.mrf.mxu0
      %v1792 = vadd.f32 %v1703, %v1791
      %v1793 = vand.u32 %v1102, 4294901760
      %1794 = vmatmul.f32.gmra.mxu0 %v1793
      %v1795 = vpop.f32.mrf.mxu0
      %v1796 = vadd.f32 %v1707, %v1795
      %v1797 = vand.u32 %v1105, 4294901760
      %1798 = vmatmul.f32.gmra.mxu0 %v1797
      %v1799 = vpop.f32.mrf.mxu0
      %v1800 = vadd.f32 %v1711, %v1799
      %v1801 = vand.u32 %v1108, 4294901760
      %1802 = vmatmul.f32.gmra.mxu0 %v1801
      %v1803 = vpop.f32.mrf.mxu0
      %v1804 = vadd.f32 %v1715, %v1803
      %v1805 = vand.u32 %v1111, 4294901760
      %1806 = vmatmul.f32.gmra.mxu0 %v1805
      %v1807 = vpop.f32.mrf.mxu0
      %v1808 = vadd.f32 %v1719, %v1807
      %v1809 = vand.u32 %v1114, 4294901760
      %1810 = vmatmul.f32.gmra.mxu0 %v1809
      %v1811 = vpop.f32.mrf.mxu0
      %v1812 = vadd.f32 %v1723, %v1811
      %v1813 = vand.u32 %v1117, 4294901760
      %1814 = vmatmul.f32.gmra.mxu0 %v1813
      %v1815 = vpop.f32.mrf.mxu0
      %v1816 = vadd.f32 %v1727, %v1815
      %v1817 = vand.u32 %v1120, 4294901760
      %1818 = vmatmul.f32.gmra.mxu0 %v1817
      %v1819 = vpop.f32.mrf.mxu0
      %v1820 = vadd.f32 %v1731, %v1819
      %v1821 = vand.u32 %v1123, 4294901760
      %1822 = vmatmul.f32.gmra.mxu0 %v1821
      %v1823 = vpop.f32.mrf.mxu0
      %v1824 = vadd.f32 %v1735, %v1823
      %v1825 = vand.u32 %v1126, 4294901760
      %1826 = vmatmul.f32.gmra.mxu0 %v1825
      %v1827 = vpop.f32.mrf.mxu0
      %v1828 = vadd.f32 %v1739, %v1827
      %1829 = vdwg.mxu0
      %v1830 = vmax.f32 %v1768, 0.0
      %v1831 = vmax.f32 %v1772, 0.0
      %v1832 = vmax.f32 %v1776, 0.0
      %v1833 = vmax.f32 %v1780, 0.0
      %v1834 = vmax.f32 %v1784, 0.0
      %v1835 = vmax.f32 %v1788, 0.0
      %v1836 = vmax.f32 %v1792, 0.0
      %v1837 = vmax.f32 %v1796, 0.0
      %v1838 = vmax.f32 %v1800, 0.0
      %v1839 = vmax.f32 %v1804, 0.0
      %v1840 = vmax.f32 %v1808, 0.0
      %v1841 = vmax.f32 %v1812, 0.0
      %v1842 = vmax.f32 %v1816, 0.0
      %v1843 = vmax.f32 %v1820, 0.0
      %v1844 = vmax.f32 %v1824, 0.0
      %v1845 = vmax.f32 %v1828, 0.0
      %v1846 = vld [vmem:[%s5] sm:$0xff]
      %v1847 = vld [vmem:[%s5 + $0x8] sm:$0xff]
      %v1848 = vld [vmem:[%s5 + $0x10] sm:$0xff]
      %v1849 = vld [vmem:[%s5 + $0x18] sm:$0xff]
      %v1850 = vld [vmem:[%s5 + $0x20] sm:$0xff]
      %v1851 = vld [vmem:[%s5 + $0x28] sm:$0xff]
      %v1852 = vld [vmem:[%s5 + $0x30] sm:$0xff]
      %v1853 = vld [vmem:[%s5 + $0x38] sm:$0xff]
      %v1854 = vld [vmem:[%s6] sm:$0x1]
      %v1856 = vperm.slane %v1854, 0
      %v1859 = vsel %vm1079, %v1830, 0
      %v1862 = vsel %vm1079, %v1831, 0
      %v1865 = vsel %vm1079, %v1832, 0
      %v1868 = vsel %vm1079, %v1833, 0
      %v1871 = vsel %vm1079, %v1834, 0
      %v1874 = vsel %vm1079, %v1835, 0
      %v1877 = vsel %vm1079, %v1836, 0
      %v1880 = vsel %vm1079, %v1837, 0
      %v1883 = vsel %vm1079, %v1838, 0
      %v1886 = vsel %vm1079, %v1839, 0
      %v1889 = vsel %vm1079, %v1840, 0
      %v1892 = vsel %vm1079, %v1841, 0
      %v1895 = vsel %vm1079, %v1842, 0
      %v1898 = vsel %vm1079, %v1843, 0
      %v1901 = vsel %vm1079, %v1844, 0
      %v1904 = vsel %vm1079, %v1845, 0
      %1906 = vmatpush.msra.mxu0 0.0
      %1907 = vmatpush.msra.mxu0 0.0
      %1908 = vmatpush.msra.mxu0 0.0
      %1909 = vmatpush.msra.mxu0 0.0
      %1910 = vmatpush.msra.mxu0 0.0
      %1911 = vmatpush.msra.mxu0 0.0
      %1912 = vmatpush.msra.mxu0 0.0
      %1913 = vmatpush.msra.mxu0 0.0
      %v1914 = vand.u32 %v1853, 4294901760
      %1915 = vmatpush.msra.mxu0 %v1914
      %v1916 = vand.u32 %v1852, 4294901760
      %1917 = vmatpush.msra.mxu0 %v1916
      %v1918 = vand.u32 %v1851, 4294901760
      %1919 = vmatpush.msra.mxu0 %v1918
      %v1920 = vand.u32 %v1850, 4294901760
      %1921 = vmatpush.msra.mxu0 %v1920
      %v1922 = vand.u32 %v1849, 4294901760
      %1923 = vmatpush.msra.mxu0 %v1922
      %v1924 = vand.u32 %v1848, 4294901760
      %1925 = vmatpush.msra.mxu0 %v1924
      %v1926 = vand.u32 %v1847, 4294901760
      %1927 = vmatpush.msra.mxu0 %v1926
      %v1928 = vand.u32 %v1846, 4294901760
      %1929 = vmatpush.msra.mxu0 %v1928
      %v1930 = vand.u32 %v1859, 4294901760
      %v1931 = vsub.f32 %v1859, %v1930
      %v1932 = vand.u32 %v1931, 4294901760
      %v1933 = vsub.f32 %v1931, %v1932
      %v1934 = vand.u32 %v1933, 4294901760
      %1935 = vmatmul.f32.gmra.mxu0 %v1934
      %v1936 = vpop.f32.mrf.mxu0
      %v1937 = vadd.f32 %v1856, %v1936
      %v1938 = vand.u32 %v1862, 4294901760
      %v1939 = vsub.f32 %v1862, %v1938
      %v1940 = vand.u32 %v1939, 4294901760
      %v1941 = vsub.f32 %v1939, %v1940
      %v1942 = vand.u32 %v1941, 4294901760
      %1943 = vmatmul.f32.gmra.mxu0 %v1942
      %v1944 = vpop.f32.mrf.mxu0
      %v1945 = vadd.f32 %v1856, %v1944
      %v1946 = vand.u32 %v1865, 4294901760
      %v1947 = vsub.f32 %v1865, %v1946
      %v1948 = vand.u32 %v1947, 4294901760
      %v1949 = vsub.f32 %v1947, %v1948
      %v1950 = vand.u32 %v1949, 4294901760
      %1951 = vmatmul.f32.gmra.mxu0 %v1950
      %v1952 = vpop.f32.mrf.mxu0
      %v1953 = vadd.f32 %v1856, %v1952
      %v1954 = vand.u32 %v1868, 4294901760
      %v1955 = vsub.f32 %v1868, %v1954
      %v1956 = vand.u32 %v1955, 4294901760
      %v1957 = vsub.f32 %v1955, %v1956
      %v1958 = vand.u32 %v1957, 4294901760
      %1959 = vmatmul.f32.gmra.mxu0 %v1958
      %v1960 = vpop.f32.mrf.mxu0
      %v1961 = vadd.f32 %v1856, %v1960
      %v1962 = vand.u32 %v1871, 4294901760
      %v1963 = vsub.f32 %v1871, %v1962
      %v1964 = vand.u32 %v1963, 4294901760
      %v1965 = vsub.f32 %v1963, %v1964
      %v1966 = vand.u32 %v1965, 4294901760
      %1967 = vmatmul.f32.gmra.mxu0 %v1966
      %v1968 = vpop.f32.mrf.mxu0
      %v1969 = vadd.f32 %v1856, %v1968
      %v1970 = vand.u32 %v1874, 4294901760
      %v1971 = vsub.f32 %v1874, %v1970
      %v1972 = vand.u32 %v1971, 4294901760
      %v1973 = vsub.f32 %v1971, %v1972
      %v1974 = vand.u32 %v1973, 4294901760
      %1975 = vmatmul.f32.gmra.mxu0 %v1974
      %v1976 = vpop.f32.mrf.mxu0
      %v1977 = vadd.f32 %v1856, %v1976
      %v1978 = vand.u32 %v1877, 4294901760
      %v1979 = vsub.f32 %v1877, %v1978
      %v1980 = vand.u32 %v1979, 4294901760
      %v1981 = vsub.f32 %v1979, %v1980
      %v1982 = vand.u32 %v1981, 4294901760
      %1983 = vmatmul.f32.gmra.mxu0 %v1982
      %v1984 = vpop.f32.mrf.mxu0
      %v1985 = vadd.f32 %v1856, %v1984
      %v1986 = vand.u32 %v1880, 4294901760
      %v1987 = vsub.f32 %v1880, %v1986
      %v1988 = vand.u32 %v1987, 4294901760
      %v1989 = vsub.f32 %v1987, %v1988
      %v1990 = vand.u32 %v1989, 4294901760
      %1991 = vmatmul.f32.gmra.mxu0 %v1990
      %v1992 = vpop.f32.mrf.mxu0
      %v1993 = vadd.f32 %v1856, %v1992
      %v1994 = vand.u32 %v1883, 4294901760
      %v1995 = vsub.f32 %v1883, %v1994
      %v1996 = vand.u32 %v1995, 4294901760
      %v1997 = vsub.f32 %v1995, %v1996
      %v1998 = vand.u32 %v1997, 4294901760
      %1999 = vmatmul.f32.gmra.mxu0 %v1998
      %v2000 = vpop.f32.mrf.mxu0
      %v2001 = vadd.f32 %v1856, %v2000
      %v2002 = vand.u32 %v1886, 4294901760
      %v2003 = vsub.f32 %v1886, %v2002
      %v2004 = vand.u32 %v2003, 4294901760
      %v2005 = vsub.f32 %v2003, %v2004
      %v2006 = vand.u32 %v2005, 4294901760
      %2007 = vmatmul.f32.gmra.mxu0 %v2006
      %v2008 = vpop.f32.mrf.mxu0
      %v2009 = vadd.f32 %v1856, %v2008
      %v2010 = vand.u32 %v1889, 4294901760
      %v2011 = vsub.f32 %v1889, %v2010
      %v2012 = vand.u32 %v2011, 4294901760
      %v2013 = vsub.f32 %v2011, %v2012
      %v2014 = vand.u32 %v2013, 4294901760
      %2015 = vmatmul.f32.gmra.mxu0 %v2014
      %v2016 = vpop.f32.mrf.mxu0
      %v2017 = vadd.f32 %v1856, %v2016
      %v2018 = vand.u32 %v1892, 4294901760
      %v2019 = vsub.f32 %v1892, %v2018
      %v2020 = vand.u32 %v2019, 4294901760
      %v2021 = vsub.f32 %v2019, %v2020
      %v2022 = vand.u32 %v2021, 4294901760
      %2023 = vmatmul.f32.gmra.mxu0 %v2022
      %v2024 = vpop.f32.mrf.mxu0
      %v2025 = vadd.f32 %v1856, %v2024
      %v2026 = vand.u32 %v1895, 4294901760
      %v2027 = vsub.f32 %v1895, %v2026
      %v2028 = vand.u32 %v2027, 4294901760
      %v2029 = vsub.f32 %v2027, %v2028
      %v2030 = vand.u32 %v2029, 4294901760
      %2031 = vmatmul.f32.gmra.mxu0 %v2030
      %v2032 = vpop.f32.mrf.mxu0
      %v2033 = vadd.f32 %v1856, %v2032
      %v2034 = vand.u32 %v1898, 4294901760
      %v2035 = vsub.f32 %v1898, %v2034
      %v2036 = vand.u32 %v2035, 4294901760
      %v2037 = vsub.f32 %v2035, %v2036
      %v2038 = vand.u32 %v2037, 4294901760
      %2039 = vmatmul.f32.gmra.mxu0 %v2038
      %v2040 = vpop.f32.mrf.mxu0
      %v2041 = vadd.f32 %v1856, %v2040
      %v2042 = vand.u32 %v1901, 4294901760
      %v2043 = vsub.f32 %v1901, %v2042
      %v2044 = vand.u32 %v2043, 4294901760
      %v2045 = vsub.f32 %v2043, %v2044
      %v2046 = vand.u32 %v2045, 4294901760
      %2047 = vmatmul.f32.gmra.mxu0 %v2046
      %v2048 = vpop.f32.mrf.mxu0
      %v2049 = vadd.f32 %v1856, %v2048
      %v2050 = vand.u32 %v1904, 4294901760
      %v2051 = vsub.f32 %v1904, %v2050
      %v2052 = vand.u32 %v2051, 4294901760
      %v2053 = vsub.f32 %v2051, %v2052
      %v2054 = vand.u32 %v2053, 4294901760
      %2055 = vmatmul.f32.gmra.mxu0 %v2054
      %v2056 = vpop.f32.mrf.mxu0
      %v2057 = vadd.f32 %v1856, %v2056
      %2058 = vdwg.mxu0
      %2059 = vmatpush.msra.mxu0 0.0
      %2060 = vmatpush.msra.mxu0 0.0
      %2061 = vmatpush.msra.mxu0 0.0
      %2062 = vmatpush.msra.mxu0 0.0
      %2063 = vmatpush.msra.mxu0 0.0
      %2064 = vmatpush.msra.mxu0 0.0
      %2065 = vmatpush.msra.mxu0 0.0
      %2066 = vmatpush.msra.mxu0 0.0
      %v2067 = vand.u32 %v1853, 4294901760
      %v2068 = vsub.f32 %v1853, %v2067
      %v2069 = vand.u32 %v2068, 4294901760
      %v2070 = vsub.f32 %v2068, %v2069
      %v2071 = vand.u32 %v2070, 4294901760
      %2072 = vmatpush.msra.mxu0 %v2071
      %v2073 = vand.u32 %v1852, 4294901760
      %v2074 = vsub.f32 %v1852, %v2073
      %v2075 = vand.u32 %v2074, 4294901760
      %v2076 = vsub.f32 %v2074, %v2075
      %v2077 = vand.u32 %v2076, 4294901760
      %2078 = vmatpush.msra.mxu0 %v2077
      %v2079 = vand.u32 %v1851, 4294901760
      %v2080 = vsub.f32 %v1851, %v2079
      %v2081 = vand.u32 %v2080, 4294901760
      %v2082 = vsub.f32 %v2080, %v2081
      %v2083 = vand.u32 %v2082, 4294901760
      %2084 = vmatpush.msra.mxu0 %v2083
      %v2085 = vand.u32 %v1850, 4294901760
      %v2086 = vsub.f32 %v1850, %v2085
      %v2087 = vand.u32 %v2086, 4294901760
      %v2088 = vsub.f32 %v2086, %v2087
      %v2089 = vand.u32 %v2088, 4294901760
      %2090 = vmatpush.msra.mxu0 %v2089
      %v2091 = vand.u32 %v1849, 4294901760
      %v2092 = vsub.f32 %v1849, %v2091
      %v2093 = vand.u32 %v2092, 4294901760
      %v2094 = vsub.f32 %v2092, %v2093
      %v2095 = vand.u32 %v2094, 4294901760
      %2096 = vmatpush.msra.mxu0 %v2095
      %v2097 = vand.u32 %v1848, 4294901760
      %v2098 = vsub.f32 %v1848, %v2097
      %v2099 = vand.u32 %v2098, 4294901760
      %v2100 = vsub.f32 %v2098, %v2099
      %v2101 = vand.u32 %v2100, 4294901760
      %2102 = vmatpush.msra.mxu0 %v2101
      %v2103 = vand.u32 %v1847, 4294901760
      %v2104 = vsub.f32 %v1847, %v2103
      %v2105 = vand.u32 %v2104, 4294901760
      %v2106 = vsub.f32 %v2104, %v2105
      %v2107 = vand.u32 %v2106, 4294901760
      %2108 = vmatpush.msra.mxu0 %v2107
      %v2109 = vand.u32 %v1846, 4294901760
      %v2110 = vsub.f32 %v1846, %v2109
      %v2111 = vand.u32 %v2110, 4294901760
      %v2112 = vsub.f32 %v2110, %v2111
      %v2113 = vand.u32 %v2112, 4294901760
      %2114 = vmatpush.msra.mxu0 %v2113
      %v2115 = vand.u32 %v1859, 4294901760
      %2116 = vmatmul.f32.gmra.mxu0 %v2115
      %v2117 = vpop.f32.mrf.mxu0
      %v2118 = vadd.f32 %v1937, %v2117
      %v2119 = vand.u32 %v1862, 4294901760
      %2120 = vmatmul.f32.gmra.mxu0 %v2119
      %v2121 = vpop.f32.mrf.mxu0
      %v2122 = vadd.f32 %v1945, %v2121
      %v2123 = vand.u32 %v1865, 4294901760
      %2124 = vmatmul.f32.gmra.mxu0 %v2123
      %v2125 = vpop.f32.mrf.mxu0
      %v2126 = vadd.f32 %v1953, %v2125
      %v2127 = vand.u32 %v1868, 4294901760
      %2128 = vmatmul.f32.gmra.mxu0 %v2127
      %v2129 = vpop.f32.mrf.mxu0
      %v2130 = vadd.f32 %v1961, %v2129
      %v2131 = vand.u32 %v1871, 4294901760
      %2132 = vmatmul.f32.gmra.mxu0 %v2131
      %v2133 = vpop.f32.mrf.mxu0
      %v2134 = vadd.f32 %v1969, %v2133
      %v2135 = vand.u32 %v1874, 4294901760
      %2136 = vmatmul.f32.gmra.mxu0 %v2135
      %v2137 = vpop.f32.mrf.mxu0
      %v2138 = vadd.f32 %v1977, %v2137
      %v2139 = vand.u32 %v1877, 4294901760
      %2140 = vmatmul.f32.gmra.mxu0 %v2139
      %v2141 = vpop.f32.mrf.mxu0
      %v2142 = vadd.f32 %v1985, %v2141
      %v2143 = vand.u32 %v1880, 4294901760
      %2144 = vmatmul.f32.gmra.mxu0 %v2143
      %v2145 = vpop.f32.mrf.mxu0
      %v2146 = vadd.f32 %v1993, %v2145
      %v2147 = vand.u32 %v1883, 4294901760
      %2148 = vmatmul.f32.gmra.mxu0 %v2147
      %v2149 = vpop.f32.mrf.mxu0
      %v2150 = vadd.f32 %v2001, %v2149
      %v2151 = vand.u32 %v1886, 4294901760
      %2152 = vmatmul.f32.gmra.mxu0 %v2151
      %v2153 = vpop.f32.mrf.mxu0
      %v2154 = vadd.f32 %v2009, %v2153
      %v2155 = vand.u32 %v1889, 4294901760
      %2156 = vmatmul.f32.gmra.mxu0 %v2155
      %v2157 = vpop.f32.mrf.mxu0
      %v2158 = vadd.f32 %v2017, %v2157
      %v2159 = vand.u32 %v1892, 4294901760
      %2160 = vmatmul.f32.gmra.mxu0 %v2159
      %v2161 = vpop.f32.mrf.mxu0
      %v2162 = vadd.f32 %v2025, %v2161
      %v2163 = vand.u32 %v1895, 4294901760
      %2164 = vmatmul.f32.gmra.mxu0 %v2163
      %v2165 = vpop.f32.mrf.mxu0
      %v2166 = vadd.f32 %v2033, %v2165
      %v2167 = vand.u32 %v1898, 4294901760
      %2168 = vmatmul.f32.gmra.mxu0 %v2167
      %v2169 = vpop.f32.mrf.mxu0
      %v2170 = vadd.f32 %v2041, %v2169
      %v2171 = vand.u32 %v1901, 4294901760
      %2172 = vmatmul.f32.gmra.mxu0 %v2171
      %v2173 = vpop.f32.mrf.mxu0
      %v2174 = vadd.f32 %v2049, %v2173
      %v2175 = vand.u32 %v1904, 4294901760
      %2176 = vmatmul.f32.gmra.mxu0 %v2175
      %v2177 = vpop.f32.mrf.mxu0
      %v2178 = vadd.f32 %v2057, %v2177
      %2179 = vdwg.mxu0
      %2180 = vmatpush.msra.mxu0 0.0
      %2181 = vmatpush.msra.mxu0 0.0
      %2182 = vmatpush.msra.mxu0 0.0
      %2183 = vmatpush.msra.mxu0 0.0
      %2184 = vmatpush.msra.mxu0 0.0
      %2185 = vmatpush.msra.mxu0 0.0
      %2186 = vmatpush.msra.mxu0 0.0
      %2187 = vmatpush.msra.mxu0 0.0
      %v2188 = vand.u32 %v1853, 4294901760
      %v2189 = vsub.f32 %v1853, %v2188
      %2190 = vmatpush.msra.mxu0 %v2189
      %v2191 = vand.u32 %v1852, 4294901760
      %v2192 = vsub.f32 %v1852, %v2191
      %2193 = vmatpush.msra.mxu0 %v2192
      %v2194 = vand.u32 %v1851, 4294901760
      %v2195 = vsub.f32 %v1851, %v2194
      %2196 = vmatpush.msra.mxu0 %v2195
      %v2197 = vand.u32 %v1850, 4294901760
      %v2198 = vsub.f32 %v1850, %v2197
      %2199 = vmatpush.msra.mxu0 %v2198
      %v2200 = vand.u32 %v1849, 4294901760
      %v2201 = vsub.f32 %v1849, %v2200
      %2202 = vmatpush.msra.mxu0 %v2201
      %v2203 = vand.u32 %v1848, 4294901760
      %v2204 = vsub.f32 %v1848, %v2203
      %2205 = vmatpush.msra.mxu0 %v2204
      %v2206 = vand.u32 %v1847, 4294901760
      %v2207 = vsub.f32 %v1847, %v2206
      %2208 = vmatpush.msra.mxu0 %v2207
      %v2209 = vand.u32 %v1846, 4294901760
      %v2210 = vsub.f32 %v1846, %v2209
      %2211 = vmatpush.msra.mxu0 %v2210
      %v2212 = vand.u32 %v1859, 4294901760
      %v2213 = vsub.f32 %v1859, %v2212
      %2214 = vmatmul.f32.gmra.mxu0 %v2213
      %v2215 = vpop.f32.mrf.mxu0
      %v2216 = vadd.f32 %v2118, %v2215
      %v2217 = vand.u32 %v1862, 4294901760
      %v2218 = vsub.f32 %v1862, %v2217
      %2219 = vmatmul.f32.gmra.mxu0 %v2218
      %v2220 = vpop.f32.mrf.mxu0
      %v2221 = vadd.f32 %v2122, %v2220
      %v2222 = vand.u32 %v1865, 4294901760
      %v2223 = vsub.f32 %v1865, %v2222
      %2224 = vmatmul.f32.gmra.mxu0 %v2223
      %v2225 = vpop.f32.mrf.mxu0
      %v2226 = vadd.f32 %v2126, %v2225
      %v2227 = vand.u32 %v1868, 4294901760
      %v2228 = vsub.f32 %v1868, %v2227
      %2229 = vmatmul.f32.gmra.mxu0 %v2228
      %v2230 = vpop.f32.mrf.mxu0
      %v2231 = vadd.f32 %v2130, %v2230
      %v2232 = vand.u32 %v1871, 4294901760
      %v2233 = vsub.f32 %v1871, %v2232
      %2234 = vmatmul.f32.gmra.mxu0 %v2233
      %v2235 = vpop.f32.mrf.mxu0
      %v2236 = vadd.f32 %v2134, %v2235
      %v2237 = vand.u32 %v1874, 4294901760
      %v2238 = vsub.f32 %v1874, %v2237
      %2239 = vmatmul.f32.gmra.mxu0 %v2238
      %v2240 = vpop.f32.mrf.mxu0
      %v2241 = vadd.f32 %v2138, %v2240
      %v2242 = vand.u32 %v1877, 4294901760
      %v2243 = vsub.f32 %v1877, %v2242
      %2244 = vmatmul.f32.gmra.mxu0 %v2243
      %v2245 = vpop.f32.mrf.mxu0
      %v2246 = vadd.f32 %v2142, %v2245
      %v2247 = vand.u32 %v1880, 4294901760
      %v2248 = vsub.f32 %v1880, %v2247
      %2249 = vmatmul.f32.gmra.mxu0 %v2248
      %v2250 = vpop.f32.mrf.mxu0
      %v2251 = vadd.f32 %v2146, %v2250
      %v2252 = vand.u32 %v1883, 4294901760
      %v2253 = vsub.f32 %v1883, %v2252
      %2254 = vmatmul.f32.gmra.mxu0 %v2253
      %v2255 = vpop.f32.mrf.mxu0
      %v2256 = vadd.f32 %v2150, %v2255
      %v2257 = vand.u32 %v1886, 4294901760
      %v2258 = vsub.f32 %v1886, %v2257
      %2259 = vmatmul.f32.gmra.mxu0 %v2258
      %v2260 = vpop.f32.mrf.mxu0
      %v2261 = vadd.f32 %v2154, %v2260
      %v2262 = vand.u32 %v1889, 4294901760
      %v2263 = vsub.f32 %v1889, %v2262
      %2264 = vmatmul.f32.gmra.mxu0 %v2263
      %v2265 = vpop.f32.mrf.mxu0
      %v2266 = vadd.f32 %v2158, %v2265
      %v2267 = vand.u32 %v1892, 4294901760
      %v2268 = vsub.f32 %v1892, %v2267
      %2269 = vmatmul.f32.gmra.mxu0 %v2268
      %v2270 = vpop.f32.mrf.mxu0
      %v2271 = vadd.f32 %v2162, %v2270
      %v2272 = vand.u32 %v1895, 4294901760
      %v2273 = vsub.f32 %v1895, %v2272
      %2274 = vmatmul.f32.gmra.mxu0 %v2273
      %v2275 = vpop.f32.mrf.mxu0
      %v2276 = vadd.f32 %v2166, %v2275
      %v2277 = vand.u32 %v1898, 4294901760
      %v2278 = vsub.f32 %v1898, %v2277
      %2279 = vmatmul.f32.gmra.mxu0 %v2278
      %v2280 = vpop.f32.mrf.mxu0
      %v2281 = vadd.f32 %v2170, %v2280
      %v2282 = vand.u32 %v1901, 4294901760
      %v2283 = vsub.f32 %v1901, %v2282
      %2284 = vmatmul.f32.gmra.mxu0 %v2283
      %v2285 = vpop.f32.mrf.mxu0
      %v2286 = vadd.f32 %v2174, %v2285
      %v2287 = vand.u32 %v1904, 4294901760
      %v2288 = vsub.f32 %v1904, %v2287
      %2289 = vmatmul.f32.gmra.mxu0 %v2288
      %v2290 = vpop.f32.mrf.mxu0
      %v2291 = vadd.f32 %v2178, %v2290
      %2292 = vdwg.mxu0
      %2293 = vmatpush.msra.mxu0 0.0
      %2294 = vmatpush.msra.mxu0 0.0
      %2295 = vmatpush.msra.mxu0 0.0
      %2296 = vmatpush.msra.mxu0 0.0
      %2297 = vmatpush.msra.mxu0 0.0
      %2298 = vmatpush.msra.mxu0 0.0
      %2299 = vmatpush.msra.mxu0 0.0
      %2300 = vmatpush.msra.mxu0 0.0
      %v2301 = vand.u32 %v1853, 4294901760
      %2302 = vmatpush.msra.mxu0 %v2301
      %v2303 = vand.u32 %v1852, 4294901760
      %2304 = vmatpush.msra.mxu0 %v2303
      %v2305 = vand.u32 %v1851, 4294901760
      %2306 = vmatpush.msra.mxu0 %v2305
      %v2307 = vand.u32 %v1850, 4294901760
      %2308 = vmatpush.msra.mxu0 %v2307
      %v2309 = vand.u32 %v1849, 4294901760
      %2310 = vmatpush.msra.mxu0 %v2309
      %v2311 = vand.u32 %v1848, 4294901760
      %2312 = vmatpush.msra.mxu0 %v2311
      %v2313 = vand.u32 %v1847, 4294901760
      %2314 = vmatpush.msra.mxu0 %v2313
      %v2315 = vand.u32 %v1846, 4294901760
      %2316 = vmatpush.msra.mxu0 %v2315
      %v2317 = vand.u32 %v1859, 4294901760
      %v2318 = vsub.f32 %v1859, %v2317
      %v2319 = vand.u32 %v2318, 4294901760
      %2320 = vmatmul.f32.gmra.mxu0 %v2319
      %v2321 = vpop.f32.mrf.mxu0
      %v2322 = vadd.f32 %v2216, %v2321
      %v2323 = vand.u32 %v1862, 4294901760
      %v2324 = vsub.f32 %v1862, %v2323
      %v2325 = vand.u32 %v2324, 4294901760
      %2326 = vmatmul.f32.gmra.mxu0 %v2325
      %v2327 = vpop.f32.mrf.mxu0
      %v2328 = vadd.f32 %v2221, %v2327
      %v2329 = vand.u32 %v1865, 4294901760
      %v2330 = vsub.f32 %v1865, %v2329
      %v2331 = vand.u32 %v2330, 4294901760
      %2332 = vmatmul.f32.gmra.mxu0 %v2331
      %v2333 = vpop.f32.mrf.mxu0
      %v2334 = vadd.f32 %v2226, %v2333
      %v2335 = vand.u32 %v1868, 4294901760
      %v2336 = vsub.f32 %v1868, %v2335
      %v2337 = vand.u32 %v2336, 4294901760
      %2338 = vmatmul.f32.gmra.mxu0 %v2337
      %v2339 = vpop.f32.mrf.mxu0
      %v2340 = vadd.f32 %v2231, %v2339
      %v2341 = vand.u32 %v1871, 4294901760
      %v2342 = vsub.f32 %v1871, %v2341
      %v2343 = vand.u32 %v2342, 4294901760
      %2344 = vmatmul.f32.gmra.mxu0 %v2343
      %v2345 = vpop.f32.mrf.mxu0
      %v2346 = vadd.f32 %v2236, %v2345
      %v2347 = vand.u32 %v1874, 4294901760
      %v2348 = vsub.f32 %v1874, %v2347
      %v2349 = vand.u32 %v2348, 4294901760
      %2350 = vmatmul.f32.gmra.mxu0 %v2349
      %v2351 = vpop.f32.mrf.mxu0
      %v2352 = vadd.f32 %v2241, %v2351
      %v2353 = vand.u32 %v1877, 4294901760
      %v2354 = vsub.f32 %v1877, %v2353
      %v2355 = vand.u32 %v2354, 4294901760
      %2356 = vmatmul.f32.gmra.mxu0 %v2355
      %v2357 = vpop.f32.mrf.mxu0
      %v2358 = vadd.f32 %v2246, %v2357
      %v2359 = vand.u32 %v1880, 4294901760
      %v2360 = vsub.f32 %v1880, %v2359
      %v2361 = vand.u32 %v2360, 4294901760
      %2362 = vmatmul.f32.gmra.mxu0 %v2361
      %v2363 = vpop.f32.mrf.mxu0
      %v2364 = vadd.f32 %v2251, %v2363
      %v2365 = vand.u32 %v1883, 4294901760
      %v2366 = vsub.f32 %v1883, %v2365
      %v2367 = vand.u32 %v2366, 4294901760
      %2368 = vmatmul.f32.gmra.mxu0 %v2367
      %v2369 = vpop.f32.mrf.mxu0
      %v2370 = vadd.f32 %v2256, %v2369
      %v2371 = vand.u32 %v1886, 4294901760
      %v2372 = vsub.f32 %v1886, %v2371
      %v2373 = vand.u32 %v2372, 4294901760
      %2374 = vmatmul.f32.gmra.mxu0 %v2373
      %v2375 = vpop.f32.mrf.mxu0
      %v2376 = vadd.f32 %v2261, %v2375
      %v2377 = vand.u32 %v1889, 4294901760
      %v2378 = vsub.f32 %v1889, %v2377
      %v2379 = vand.u32 %v2378, 4294901760
      %2380 = vmatmul.f32.gmra.mxu0 %v2379
      %v2381 = vpop.f32.mrf.mxu0
      %v2382 = vadd.f32 %v2266, %v2381
      %v2383 = vand.u32 %v1892, 4294901760
      %v2384 = vsub.f32 %v1892, %v2383
      %v2385 = vand.u32 %v2384, 4294901760
      %2386 = vmatmul.f32.gmra.mxu0 %v2385
      %v2387 = vpop.f32.mrf.mxu0
      %v2388 = vadd.f32 %v2271, %v2387
      %v2389 = vand.u32 %v1895, 4294901760
      %v2390 = vsub.f32 %v1895, %v2389
      %v2391 = vand.u32 %v2390, 4294901760
      %2392 = vmatmul.f32.gmra.mxu0 %v2391
      %v2393 = vpop.f32.mrf.mxu0
      %v2394 = vadd.f32 %v2276, %v2393
      %v2395 = vand.u32 %v1898, 4294901760
      %v2396 = vsub.f32 %v1898, %v2395
      %v2397 = vand.u32 %v2396, 4294901760
      %2398 = vmatmul.f32.gmra.mxu0 %v2397
      %v2399 = vpop.f32.mrf.mxu0
      %v2400 = vadd.f32 %v2281, %v2399
      %v2401 = vand.u32 %v1901, 4294901760
      %v2402 = vsub.f32 %v1901, %v2401
      %v2403 = vand.u32 %v2402, 4294901760
      %2404 = vmatmul.f32.gmra.mxu0 %v2403
      %v2405 = vpop.f32.mrf.mxu0
      %v2406 = vadd.f32 %v2286, %v2405
      %v2407 = vand.u32 %v1904, 4294901760
      %v2408 = vsub.f32 %v1904, %v2407
      %v2409 = vand.u32 %v2408, 4294901760
      %2410 = vmatmul.f32.gmra.mxu0 %v2409
      %v2411 = vpop.f32.mrf.mxu0
      %v2412 = vadd.f32 %v2291, %v2411
      %2413 = vdwg.mxu0
      %2414 = vmatpush.msra.mxu0 0.0
      %2415 = vmatpush.msra.mxu0 0.0
      %2416 = vmatpush.msra.mxu0 0.0
      %2417 = vmatpush.msra.mxu0 0.0
      %2418 = vmatpush.msra.mxu0 0.0
      %2419 = vmatpush.msra.mxu0 0.0
      %2420 = vmatpush.msra.mxu0 0.0
      %2421 = vmatpush.msra.mxu0 0.0
      %v2422 = vand.u32 %v1853, 4294901760
      %v2423 = vsub.f32 %v1853, %v2422
      %v2424 = vand.u32 %v2423, 4294901760
      %2425 = vmatpush.msra.mxu0 %v2424
      %v2426 = vand.u32 %v1852, 4294901760
      %v2427 = vsub.f32 %v1852, %v2426
      %v2428 = vand.u32 %v2427, 4294901760
      %2429 = vmatpush.msra.mxu0 %v2428
      %v2430 = vand.u32 %v1851, 4294901760
      %v2431 = vsub.f32 %v1851, %v2430
      %v2432 = vand.u32 %v2431, 4294901760
      %2433 = vmatpush.msra.mxu0 %v2432
      %v2434 = vand.u32 %v1850, 4294901760
      %v2435 = vsub.f32 %v1850, %v2434
      %v2436 = vand.u32 %v2435, 4294901760
      %2437 = vmatpush.msra.mxu0 %v2436
      %v2438 = vand.u32 %v1849, 4294901760
      %v2439 = vsub.f32 %v1849, %v2438
      %v2440 = vand.u32 %v2439, 4294901760
      %2441 = vmatpush.msra.mxu0 %v2440
      %v2442 = vand.u32 %v1848, 4294901760
      %v2443 = vsub.f32 %v1848, %v2442
      %v2444 = vand.u32 %v2443, 4294901760
      %2445 = vmatpush.msra.mxu0 %v2444
      %v2446 = vand.u32 %v1847, 4294901760
      %v2447 = vsub.f32 %v1847, %v2446
      %v2448 = vand.u32 %v2447, 4294901760
      %2449 = vmatpush.msra.mxu0 %v2448
      %v2450 = vand.u32 %v1846, 4294901760
      %v2451 = vsub.f32 %v1846, %v2450
      %v2452 = vand.u32 %v2451, 4294901760
      %2453 = vmatpush.msra.mxu0 %v2452
      %v2454 = vand.u32 %v1859, 4294901760
      %2455 = vmatmul.f32.gmra.mxu0 %v2454
      %v2456 = vpop.f32.mrf.mxu0
      %v2457 = vadd.f32 %v2322, %v2456
      %v2458 = vand.u32 %v1862, 4294901760
      %2459 = vmatmul.f32.gmra.mxu0 %v2458
      %v2460 = vpop.f32.mrf.mxu0
      %v2461 = vadd.f32 %v2328, %v2460
      %v2462 = vand.u32 %v1865, 4294901760
      %2463 = vmatmul.f32.gmra.mxu0 %v2462
      %v2464 = vpop.f32.mrf.mxu0
      %v2465 = vadd.f32 %v2334, %v2464
      %v2466 = vand.u32 %v1868, 4294901760
      %2467 = vmatmul.f32.gmra.mxu0 %v2466
      %v2468 = vpop.f32.mrf.mxu0
      %v2469 = vadd.f32 %v2340, %v2468
      %v2470 = vand.u32 %v1871, 4294901760
      %2471 = vmatmul.f32.gmra.mxu0 %v2470
      %v2472 = vpop.f32.mrf.mxu0
      %v2473 = vadd.f32 %v2346, %v2472
      %v2474 = vand.u32 %v1874, 4294901760
      %2475 = vmatmul.f32.gmra.mxu0 %v2474
      %v2476 = vpop.f32.mrf.mxu0
      %v2477 = vadd.f32 %v2352, %v2476
      %v2478 = vand.u32 %v1877, 4294901760
      %2479 = vmatmul.f32.gmra.mxu0 %v2478
      %v2480 = vpop.f32.mrf.mxu0
      %v2481 = vadd.f32 %v2358, %v2480
      %v2482 = vand.u32 %v1880, 4294901760
      %2483 = vmatmul.f32.gmra.mxu0 %v2482
      %v2484 = vpop.f32.mrf.mxu0
      %v2485 = vadd.f32 %v2364, %v2484
      %v2486 = vand.u32 %v1883, 4294901760
      %2487 = vmatmul.f32.gmra.mxu0 %v2486
      %v2488 = vpop.f32.mrf.mxu0
      %v2489 = vadd.f32 %v2370, %v2488
      %v2490 = vand.u32 %v1886, 4294901760
      %2491 = vmatmul.f32.gmra.mxu0 %v2490
      %v2492 = vpop.f32.mrf.mxu0
      %v2493 = vadd.f32 %v2376, %v2492
      %v2494 = vand.u32 %v1889, 4294901760
      %2495 = vmatmul.f32.gmra.mxu0 %v2494
      %v2496 = vpop.f32.mrf.mxu0
      %v2497 = vadd.f32 %v2382, %v2496
      %v2498 = vand.u32 %v1892, 4294901760
      %2499 = vmatmul.f32.gmra.mxu0 %v2498
      %v2500 = vpop.f32.mrf.mxu0
      %v2501 = vadd.f32 %v2388, %v2500
      %v2502 = vand.u32 %v1895, 4294901760
      %2503 = vmatmul.f32.gmra.mxu0 %v2502
      %v2504 = vpop.f32.mrf.mxu0
      %v2505 = vadd.f32 %v2394, %v2504
      %v2506 = vand.u32 %v1898, 4294901760
      %2507 = vmatmul.f32.gmra.mxu0 %v2506
      %v2508 = vpop.f32.mrf.mxu0
      %v2509 = vadd.f32 %v2400, %v2508
      %v2510 = vand.u32 %v1901, 4294901760
      %2511 = vmatmul.f32.gmra.mxu0 %v2510
      %v2512 = vpop.f32.mrf.mxu0
      %v2513 = vadd.f32 %v2406, %v2512
      %v2514 = vand.u32 %v1904, 4294901760
      %2515 = vmatmul.f32.gmra.mxu0 %v2514
      %v2516 = vpop.f32.mrf.mxu0
      %v2517 = vadd.f32 %v2412, %v2516
      %2518 = vdwg.mxu0
      %2519 = vmatpush.msra.mxu0 0.0
      %2520 = vmatpush.msra.mxu0 0.0
      %2521 = vmatpush.msra.mxu0 0.0
      %2522 = vmatpush.msra.mxu0 0.0
      %2523 = vmatpush.msra.mxu0 0.0
      %2524 = vmatpush.msra.mxu0 0.0
      %2525 = vmatpush.msra.mxu0 0.0
      %2526 = vmatpush.msra.mxu0 0.0
      %v2527 = vand.u32 %v1853, 4294901760
      %2528 = vmatpush.msra.mxu0 %v2527
      %v2529 = vand.u32 %v1852, 4294901760
      %2530 = vmatpush.msra.mxu0 %v2529
      %v2531 = vand.u32 %v1851, 4294901760
      %2532 = vmatpush.msra.mxu0 %v2531
      %v2533 = vand.u32 %v1850, 4294901760
      %2534 = vmatpush.msra.mxu0 %v2533
      %v2535 = vand.u32 %v1849, 4294901760
      %2536 = vmatpush.msra.mxu0 %v2535
      %v2537 = vand.u32 %v1848, 4294901760
      %2538 = vmatpush.msra.mxu0 %v2537
      %v2539 = vand.u32 %v1847, 4294901760
      %2540 = vmatpush.msra.mxu0 %v2539
      %v2541 = vand.u32 %v1846, 4294901760
      %2542 = vmatpush.msra.mxu0 %v2541
      %v2543 = vand.u32 %v1859, 4294901760
      %2544 = vmatmul.f32.gmra.mxu0 %v2543
      %v2545 = vpop.f32.mrf.mxu0
      %v2546 = vadd.f32 %v2457, %v2545
      %v2547 = vand.u32 %v1862, 4294901760
      %2548 = vmatmul.f32.gmra.mxu0 %v2547
      %v2549 = vpop.f32.mrf.mxu0
      %v2550 = vadd.f32 %v2461, %v2549
      %v2551 = vand.u32 %v1865, 4294901760
      %2552 = vmatmul.f32.gmra.mxu0 %v2551
      %v2553 = vpop.f32.mrf.mxu0
      %v2554 = vadd.f32 %v2465, %v2553
      %v2555 = vand.u32 %v1868, 4294901760
      %2556 = vmatmul.f32.gmra.mxu0 %v2555
      %v2557 = vpop.f32.mrf.mxu0
      %v2558 = vadd.f32 %v2469, %v2557
      %v2559 = vand.u32 %v1871, 4294901760
      %2560 = vmatmul.f32.gmra.mxu0 %v2559
      %v2561 = vpop.f32.mrf.mxu0
      %v2562 = vadd.f32 %v2473, %v2561
      %v2563 = vand.u32 %v1874, 4294901760
      %2564 = vmatmul.f32.gmra.mxu0 %v2563
      %v2565 = vpop.f32.mrf.mxu0
      %v2566 = vadd.f32 %v2477, %v2565
      %v2567 = vand.u32 %v1877, 4294901760
      %2568 = vmatmul.f32.gmra.mxu0 %v2567
      %v2569 = vpop.f32.mrf.mxu0
      %v2570 = vadd.f32 %v2481, %v2569
      %v2571 = vand.u32 %v1880, 4294901760
      %2572 = vmatmul.f32.gmra.mxu0 %v2571
      %v2573 = vpop.f32.mrf.mxu0
      %v2574 = vadd.f32 %v2485, %v2573
      %v2575 = vand.u32 %v1883, 4294901760
      %2576 = vmatmul.f32.gmra.mxu0 %v2575
      %v2577 = vpop.f32.mrf.mxu0
      %v2578 = vadd.f32 %v2489, %v2577
      %v2579 = vand.u32 %v1886, 4294901760
      %2580 = vmatmul.f32.gmra.mxu0 %v2579
      %v2581 = vpop.f32.mrf.mxu0
      %v2582 = vadd.f32 %v2493, %v2581
      %v2583 = vand.u32 %v1889, 4294901760
      %2584 = vmatmul.f32.gmra.mxu0 %v2583
      %v2585 = vpop.f32.mrf.mxu0
      %v2586 = vadd.f32 %v2497, %v2585
      %v2587 = vand.u32 %v1892, 4294901760
      %2588 = vmatmul.f32.gmra.mxu0 %v2587
      %v2589 = vpop.f32.mrf.mxu0
      %v2590 = vadd.f32 %v2501, %v2589
      %v2591 = vand.u32 %v1895, 4294901760
      %2592 = vmatmul.f32.gmra.mxu0 %v2591
      %v2593 = vpop.f32.mrf.mxu0
      %v2594 = vadd.f32 %v2505, %v2593
      %v2595 = vand.u32 %v1898, 4294901760
      %2596 = vmatmul.f32.gmra.mxu0 %v2595
      %v2597 = vpop.f32.mrf.mxu0
      %v2598 = vadd.f32 %v2509, %v2597
      %v2599 = vand.u32 %v1901, 4294901760
      %2600 = vmatmul.f32.gmra.mxu0 %v2599
      %v2601 = vpop.f32.mrf.mxu0
      %v2602 = vadd.f32 %v2513, %v2601
      %v2603 = vand.u32 %v1904, 4294901760
      %2604 = vmatmul.f32.gmra.mxu0 %v2603
      %v2605 = vpop.f32.mrf.mxu0
      %v2606 = vadd.f32 %v2517, %v2605
      %2607 = vdwg.mxu0
      %v2608 = vsub.f32 0.0, %v2546
      %v2609 = vsub.f32 0.0, %v2550
      %v2610 = vsub.f32 0.0, %v2554
      %v2611 = vsub.f32 0.0, %v2558
      %v2612 = vsub.f32 0.0, %v2562
      %v2613 = vsub.f32 0.0, %v2566
      %v2614 = vsub.f32 0.0, %v2570
      %v2615 = vsub.f32 0.0, %v2574
      %v2616 = vsub.f32 0.0, %v2578
      %v2617 = vsub.f32 0.0, %v2582
      %v2618 = vsub.f32 0.0, %v2586
      %v2619 = vsub.f32 0.0, %v2590
      %v2620 = vsub.f32 0.0, %v2594
      %v2621 = vsub.f32 0.0, %v2598
      %v2622 = vsub.f32 0.0, %v2602
      %v2623 = vsub.f32 0.0, %v2606
      %v2624 = vmul.f32 %v2608, 1.442695
      %v2625 = vpow.pop %v2624
      %v2626 = vmul.f32 %v2609, 1.442695
      %v2627 = vpow.pop %v2626
      %v2628 = vmul.f32 %v2610, 1.442695
      %v2629 = vpow.pop %v2628
      %v2630 = vmul.f32 %v2611, 1.442695
      %v2631 = vpow.pop %v2630
      %v2632 = vmul.f32 %v2612, 1.442695
      %v2633 = vpow.pop %v2632
      %v2634 = vmul.f32 %v2613, 1.442695
      %v2635 = vpow.pop %v2634
      %v2636 = vmul.f32 %v2614, 1.442695
      %v2637 = vpow.pop %v2636
      %v2638 = vmul.f32 %v2615, 1.442695
      %v2639 = vpow.pop %v2638
      %v2640 = vmul.f32 %v2616, 1.442695
      %v2641 = vpow.pop %v2640
      %v2642 = vmul.f32 %v2617, 1.442695
      %v2643 = vpow.pop %v2642
      %v2644 = vmul.f32 %v2618, 1.442695
      %v2645 = vpow.pop %v2644
      %v2646 = vmul.f32 %v2619, 1.442695
      %v2647 = vpow.pop %v2646
      %v2648 = vmul.f32 %v2620, 1.442695
      %v2649 = vpow.pop %v2648
      %v2650 = vmul.f32 %v2621, 1.442695
      %v2651 = vpow.pop %v2650
      %v2652 = vmul.f32 %v2622, 1.442695
      %v2653 = vpow.pop %v2652
      %v2654 = vmul.f32 %v2623, 1.442695
      %v2655 = vpow.pop %v2654
      %v2656 = vadd.f32 %v2625, 1.0
      %v2657 = vadd.f32 %v2627, 1.0
      %v2658 = vadd.f32 %v2629, 1.0
      %v2659 = vadd.f32 %v2631, 1.0
      %v2660 = vadd.f32 %v2633, 1.0
      %v2661 = vadd.f32 %v2635, 1.0
      %v2662 = vadd.f32 %v2637, 1.0
      %v2663 = vadd.f32 %v2639, 1.0
      %v2664 = vadd.f32 %v2641, 1.0
      %v2665 = vadd.f32 %v2643, 1.0
      %v2666 = vadd.f32 %v2645, 1.0
      %v2667 = vadd.f32 %v2647, 1.0
      %v2668 = vadd.f32 %v2649, 1.0
      %v2669 = vadd.f32 %v2651, 1.0
      %v2670 = vadd.f32 %v2653, 1.0
      %v2671 = vadd.f32 %v2655, 1.0
      %v2672 = vrcp.pop %v2656
      %v2673 = vmul.f32 %v2656, %v2672
      %v2674 = vsub.f32 1.0, %v2673
      %v2675 = vmul.f32 %v2672, %v2674
      %v2676 = vadd.f32 %v2672, %v2675
      %vm2677 = vweird.f32 %v2656
      %vm2678 = vweird.f32 %v2672
      %vm2679 = vmor %vm2677, %vm2678
      %v2680 = vsel %vm2679, %v2672, %v2676
      %v2681 = vand.u32 2147483647, %v2656
      %vm2682 = vcmp.eq.f32.partialorder %v2681, 8.507059e+37
      %v2683 = vand.u32 %v2656, 2147483648
      %v2684 = vor.u32 1.1754944e-38, %v2683
      %v2685 = vsel %vm2682, %v2684, %v2680
      %v2686 = vmul.f32 1.0, %v2685
      %v2687 = vrcp.pop %v2657
      %v2688 = vmul.f32 %v2657, %v2687
      %v2689 = vsub.f32 1.0, %v2688
      %v2690 = vmul.f32 %v2687, %v2689
      %v2691 = vadd.f32 %v2687, %v2690
      %vm2692 = vweird.f32 %v2657
      %vm2693 = vweird.f32 %v2687
      %vm2694 = vmor %vm2692, %vm2693
      %v2695 = vsel %vm2694, %v2687, %v2691
      %v2696 = vand.u32 2147483647, %v2657
      %vm2697 = vcmp.eq.f32.partialorder %v2696, 8.507059e+37
      %v2698 = vand.u32 %v2657, 2147483648
      %v2699 = vor.u32 1.1754944e-38, %v2698
      %v2700 = vsel %vm2697, %v2699, %v2695
      %v2701 = vmul.f32 1.0, %v2700
      %v2702 = vrcp.pop %v2658
      %v2703 = vmul.f32 %v2658, %v2702
      %v2704 = vsub.f32 1.0, %v2703
      %v2705 = vmul.f32 %v2702, %v2704
      %v2706 = vadd.f32 %v2702, %v2705
      %vm2707 = vweird.f32 %v2658
      %vm2708 = vweird.f32 %v2702
      %vm2709 = vmor %vm2707, %vm2708
      %v2710 = vsel %vm2709, %v2702, %v2706
      %v2711 = vand.u32 2147483647, %v2658
      %vm2712 = vcmp.eq.f32.partialorder %v2711, 8.507059e+37
      %v2713 = vand.u32 %v2658, 2147483648
      %v2714 = vor.u32 1.1754944e-38, %v2713
      %v2715 = vsel %vm2712, %v2714, %v2710
      %v2716 = vmul.f32 1.0, %v2715
      %v2717 = vrcp.pop %v2659
      %v2718 = vmul.f32 %v2659, %v2717
      %v2719 = vsub.f32 1.0, %v2718
      %v2720 = vmul.f32 %v2717, %v2719
      %v2721 = vadd.f32 %v2717, %v2720
      %vm2722 = vweird.f32 %v2659
      %vm2723 = vweird.f32 %v2717
      %vm2724 = vmor %vm2722, %vm2723
      %v2725 = vsel %vm2724, %v2717, %v2721
      %v2726 = vand.u32 2147483647, %v2659
      %vm2727 = vcmp.eq.f32.partialorder %v2726, 8.507059e+37
      %v2728 = vand.u32 %v2659, 2147483648
      %v2729 = vor.u32 1.1754944e-38, %v2728
      %v2730 = vsel %vm2727, %v2729, %v2725
      %v2731 = vmul.f32 1.0, %v2730
      %v2732 = vrcp.pop %v2660
      %v2733 = vmul.f32 %v2660, %v2732
      %v2734 = vsub.f32 1.0, %v2733
      %v2735 = vmul.f32 %v2732, %v2734
      %v2736 = vadd.f32 %v2732, %v2735
      %vm2737 = vweird.f32 %v2660
      %vm2738 = vweird.f32 %v2732
      %vm2739 = vmor %vm2737, %vm2738
      %v2740 = vsel %vm2739, %v2732, %v2736
      %v2741 = vand.u32 2147483647, %v2660
      %vm2742 = vcmp.eq.f32.partialorder %v2741, 8.507059e+37
      %v2743 = vand.u32 %v2660, 2147483648
      %v2744 = vor.u32 1.1754944e-38, %v2743
      %v2745 = vsel %vm2742, %v2744, %v2740
      %v2746 = vmul.f32 1.0, %v2745
      %v2747 = vrcp.pop %v2661
      %v2748 = vmul.f32 %v2661, %v2747
      %v2749 = vsub.f32 1.0, %v2748
      %v2750 = vmul.f32 %v2747, %v2749
      %v2751 = vadd.f32 %v2747, %v2750
      %vm2752 = vweird.f32 %v2661
      %vm2753 = vweird.f32 %v2747
      %vm2754 = vmor %vm2752, %vm2753
      %v2755 = vsel %vm2754, %v2747, %v2751
      %v2756 = vand.u32 2147483647, %v2661
      %vm2757 = vcmp.eq.f32.partialorder %v2756, 8.507059e+37
      %v2758 = vand.u32 %v2661, 2147483648
      %v2759 = vor.u32 1.1754944e-38, %v2758
      %v2760 = vsel %vm2757, %v2759, %v2755
      %v2761 = vmul.f32 1.0, %v2760
      %v2762 = vrcp.pop %v2662
      %v2763 = vmul.f32 %v2662, %v2762
      %v2764 = vsub.f32 1.0, %v2763
      %v2765 = vmul.f32 %v2762, %v2764
      %v2766 = vadd.f32 %v2762, %v2765
      %vm2767 = vweird.f32 %v2662
      %vm2768 = vweird.f32 %v2762
      %vm2769 = vmor %vm2767, %vm2768
      %v2770 = vsel %vm2769, %v2762, %v2766
      %v2771 = vand.u32 2147483647, %v2662
      %vm2772 = vcmp.eq.f32.partialorder %v2771, 8.507059e+37
      %v2773 = vand.u32 %v2662, 2147483648
      %v2774 = vor.u32 1.1754944e-38, %v2773
      %v2775 = vsel %vm2772, %v2774, %v2770
      %v2776 = vmul.f32 1.0, %v2775
      %v2777 = vrcp.pop %v2663
      %v2778 = vmul.f32 %v2663, %v2777
      %v2779 = vsub.f32 1.0, %v2778
      %v2780 = vmul.f32 %v2777, %v2779
      %v2781 = vadd.f32 %v2777, %v2780
      %vm2782 = vweird.f32 %v2663
      %vm2783 = vweird.f32 %v2777
      %vm2784 = vmor %vm2782, %vm2783
      %v2785 = vsel %vm2784, %v2777, %v2781
      %v2786 = vand.u32 2147483647, %v2663
      %vm2787 = vcmp.eq.f32.partialorder %v2786, 8.507059e+37
      %v2788 = vand.u32 %v2663, 2147483648
      %v2789 = vor.u32 1.1754944e-38, %v2788
      %v2790 = vsel %vm2787, %v2789, %v2785
      %v2791 = vmul.f32 1.0, %v2790
      %v2792 = vrcp.pop %v2664
      %v2793 = vmul.f32 %v2664, %v2792
      %v2794 = vsub.f32 1.0, %v2793
      %v2795 = vmul.f32 %v2792, %v2794
      %v2796 = vadd.f32 %v2792, %v2795
      %vm2797 = vweird.f32 %v2664
      %vm2798 = vweird.f32 %v2792
      %vm2799 = vmor %vm2797, %vm2798
      %v2800 = vsel %vm2799, %v2792, %v2796
      %v2801 = vand.u32 2147483647, %v2664
      %vm2802 = vcmp.eq.f32.partialorder %v2801, 8.507059e+37
      %v2803 = vand.u32 %v2664, 2147483648
      %v2804 = vor.u32 1.1754944e-38, %v2803
      %v2805 = vsel %vm2802, %v2804, %v2800
      %v2806 = vmul.f32 1.0, %v2805
      %v2807 = vrcp.pop %v2665
      %v2808 = vmul.f32 %v2665, %v2807
      %v2809 = vsub.f32 1.0, %v2808
      %v2810 = vmul.f32 %v2807, %v2809
      %v2811 = vadd.f32 %v2807, %v2810
      %vm2812 = vweird.f32 %v2665
      %vm2813 = vweird.f32 %v2807
      %vm2814 = vmor %vm2812, %vm2813
      %v2815 = vsel %vm2814, %v2807, %v2811
      %v2816 = vand.u32 2147483647, %v2665
      %vm2817 = vcmp.eq.f32.partialorder %v2816, 8.507059e+37
      %v2818 = vand.u32 %v2665, 2147483648
      %v2819 = vor.u32 1.1754944e-38, %v2818
      %v2820 = vsel %vm2817, %v2819, %v2815
      %v2821 = vmul.f32 1.0, %v2820
      %v2822 = vrcp.pop %v2666
      %v2823 = vmul.f32 %v2666, %v2822
      %v2824 = vsub.f32 1.0, %v2823
      %v2825 = vmul.f32 %v2822, %v2824
      %v2826 = vadd.f32 %v2822, %v2825
      %vm2827 = vweird.f32 %v2666
      %vm2828 = vweird.f32 %v2822
      %vm2829 = vmor %vm2827, %vm2828
      %v2830 = vsel %vm2829, %v2822, %v2826
      %v2831 = vand.u32 2147483647, %v2666
      %vm2832 = vcmp.eq.f32.partialorder %v2831, 8.507059e+37
      %v2833 = vand.u32 %v2666, 2147483648
      %v2834 = vor.u32 1.1754944e-38, %v2833
      %v2835 = vsel %vm2832, %v2834, %v2830
      %v2836 = vmul.f32 1.0, %v2835
      %v2837 = vrcp.pop %v2667
      %v2838 = vmul.f32 %v2667, %v2837
      %v2839 = vsub.f32 1.0, %v2838
      %v2840 = vmul.f32 %v2837, %v2839
      %v2841 = vadd.f32 %v2837, %v2840
      %vm2842 = vweird.f32 %v2667
      %vm2843 = vweird.f32 %v2837
      %vm2844 = vmor %vm2842, %vm2843
      %v2845 = vsel %vm2844, %v2837, %v2841
      %v2846 = vand.u32 2147483647, %v2667
      %vm2847 = vcmp.eq.f32.partialorder %v2846, 8.507059e+37
      %v2848 = vand.u32 %v2667, 2147483648
      %v2849 = vor.u32 1.1754944e-38, %v2848
      %v2850 = vsel %vm2847, %v2849, %v2845
      %v2851 = vmul.f32 1.0, %v2850
      %v2852 = vrcp.pop %v2668
      %v2853 = vmul.f32 %v2668, %v2852
      %v2854 = vsub.f32 1.0, %v2853
      %v2855 = vmul.f32 %v2852, %v2854
      %v2856 = vadd.f32 %v2852, %v2855
      %vm2857 = vweird.f32 %v2668
      %vm2858 = vweird.f32 %v2852
      %vm2859 = vmor %vm2857, %vm2858
      %v2860 = vsel %vm2859, %v2852, %v2856
      %v2861 = vand.u32 2147483647, %v2668
      %vm2862 = vcmp.eq.f32.partialorder %v2861, 8.507059e+37
      %v2863 = vand.u32 %v2668, 2147483648
      %v2864 = vor.u32 1.1754944e-38, %v2863
      %v2865 = vsel %vm2862, %v2864, %v2860
      %v2866 = vmul.f32 1.0, %v2865
      %v2867 = vrcp.pop %v2669
      %v2868 = vmul.f32 %v2669, %v2867
      %v2869 = vsub.f32 1.0, %v2868
      %v2870 = vmul.f32 %v2867, %v2869
      %v2871 = vadd.f32 %v2867, %v2870
      %vm2872 = vweird.f32 %v2669
      %vm2873 = vweird.f32 %v2867
      %vm2874 = vmor %vm2872, %vm2873
      %v2875 = vsel %vm2874, %v2867, %v2871
      %v2876 = vand.u32 2147483647, %v2669
      %vm2877 = vcmp.eq.f32.partialorder %v2876, 8.507059e+37
      %v2878 = vand.u32 %v2669, 2147483648
      %v2879 = vor.u32 1.1754944e-38, %v2878
      %v2880 = vsel %vm2877, %v2879, %v2875
      %v2881 = vmul.f32 1.0, %v2880
      %v2882 = vrcp.pop %v2670
      %v2883 = vmul.f32 %v2670, %v2882
      %v2884 = vsub.f32 1.0, %v2883
      %v2885 = vmul.f32 %v2882, %v2884
      %v2886 = vadd.f32 %v2882, %v2885
      %vm2887 = vweird.f32 %v2670
      %vm2888 = vweird.f32 %v2882
      %vm2889 = vmor %vm2887, %vm2888
      %v2890 = vsel %vm2889, %v2882, %v2886
      %v2891 = vand.u32 2147483647, %v2670
      %vm2892 = vcmp.eq.f32.partialorder %v2891, 8.507059e+37
      %v2893 = vand.u32 %v2670, 2147483648
      %v2894 = vor.u32 1.1754944e-38, %v2893
      %v2895 = vsel %vm2892, %v2894, %v2890
      %v2896 = vmul.f32 1.0, %v2895
      %v2897 = vrcp.pop %v2671
      %v2898 = vmul.f32 %v2671, %v2897
      %v2899 = vsub.f32 1.0, %v2898
      %v2900 = vmul.f32 %v2897, %v2899
      %v2901 = vadd.f32 %v2897, %v2900
      %vm2902 = vweird.f32 %v2671
      %vm2903 = vweird.f32 %v2897
      %vm2904 = vmor %vm2902, %vm2903
      %v2905 = vsel %vm2904, %v2897, %v2901
      %v2906 = vand.u32 2147483647, %v2671
      %vm2907 = vcmp.eq.f32.partialorder %v2906, 8.507059e+37
      %v2908 = vand.u32 %v2671, 2147483648
      %v2909 = vor.u32 1.1754944e-38, %v2908
      %v2910 = vsel %vm2907, %v2909, %v2905
      %v2911 = vmul.f32 1.0, %v2910
      %vm2912 = vcmask 48128
      %2913 = vst.msk [vmem:[%s280] sm:$0xff] %vm2912, %v2686
      %2914 = vst.msk [vmem:[%s280 + $0x8] sm:$0xff] %vm2912, %v2701
      %2915 = vst.msk [vmem:[%s280 + $0x10] sm:$0xff] %vm2912, %v2716
      %2916 = vst.msk [vmem:[%s280 + $0x18] sm:$0xff] %vm2912, %v2731
      %2917 = vst.msk [vmem:[%s280 + $0x20] sm:$0xff] %vm2912, %v2746
      %2918 = vst.msk [vmem:[%s280 + $0x28] sm:$0xff] %vm2912, %v2761
      %2919 = vst.msk [vmem:[%s280 + $0x30] sm:$0xff] %vm2912, %v2776
      %2920 = vst.msk [vmem:[%s280 + $0x38] sm:$0xff] %vm2912, %v2791
      %2921 = vst.msk [vmem:[%s280 + $0x40] sm:$0xff] %vm2912, %v2806
      %2922 = vst.msk [vmem:[%s280 + $0x48] sm:$0xff] %vm2912, %v2821
      %2923 = vst.msk [vmem:[%s280 + $0x50] sm:$0xff] %vm2912, %v2836
      %2924 = vst.msk [vmem:[%s280 + $0x58] sm:$0xff] %vm2912, %v2851
      %2925 = vst.msk [vmem:[%s280 + $0x60] sm:$0xff] %vm2912, %v2866
      %2926 = vst.msk [vmem:[%s280 + $0x68] sm:$0xff] %vm2912, %v2881
      %2927 = vst.msk [vmem:[%s280 + $0x70] sm:$0xff] %vm2912, %v2896
      %2928 = vst.msk [vmem:[%s280 + $0x78] sm:$0xff] %vm2912, %v2911
      %s2929 = smul.u32 16, %s18
      %p2930 = scmp.lt.s32.totalorder %s2929, 31
      %s2931 = scalar_select %p2930, %s2929, 31
      %s2932 = smul.addr %s2931, 8
      %s2933 = scalar_lea.vmem %s7, %s2932
      // Predicated region
      $region49: #{tpu_custom_call.1} parent=47 // pred_check
        %p2934 = pneg %p188
      $region50: #{tpu_custom_call.1} parent=47 // pred_check_branch
        %2936 = sbr.rel (%p2934) target = $region52
      $region51: #{tpu_custom_call.1} parent=47 // pred_region
        %s2937 = smul.u32 16, %s18
      $region52: #{tpu_custom_call.1} parent=47 // pred_fallthru
        _
    $region48: #{tpu_custom_call.1} parent=5 // pred_fallthru
      _
    %p2938 = scmp.le.s32.totalorder 2, %s13
    // Predicated region
    $region53: #{tpu_custom_call.1} parent=5 // pred_check
      %p2939 = pneg %p2938
    $region54: #{tpu_custom_call.1} parent=5 // pred_check_branch
      %2941 = sbr.rel (%p2939) target = $region56
    $region55: #{tpu_custom_call.1} parent=5 // pred_region
      %s2942 = ssub.s32 %s13, 2
      // Predicated region
      $region57: #{tpu_custom_call.1} parent=55 // pred_check
        %p2943 = pneg %p194
      $region58: #{tpu_custom_call.1} parent=55 // pred_check_branch
        %2945 = sbr.rel (%p2943) target = $region60
      $region59: #{tpu_custom_call.1} parent=55 // pred_region
        %s2946 = smul.u32 16, %s19
        %p2947 = scmp.lt.s32.totalorder %s2946, 31
        %s2948 = scalar_select %p2947, %s2946, 31
        %s2949 = smul.addr %s2948, 8
        %s2950 = scalar_lea.vmem %s7, %s2949
      $region60: #{tpu_custom_call.1} parent=55 // pred_fallthru
        _
    $region56: #{tpu_custom_call.1} parent=5 // pred_fallthru
      _
  $region6: #{tpu_custom_call.1} parent=0 // loop_footer
    %s17 = sadd.s32 1, %s13
  $region7: #{tpu_custom_call.1} parent=0 // loop_footer_branch
    %12 = sbr.rel target = $region3
  $region8: #{tpu_custom_call.1} parent=0 // loop_exit
    _

</llo_original>
